<compile_context>
chip_gen: v5e
topology: v5e:2x2
jax: 0.10.0
libtpu: 0.0.40
codegen_flags: <defaults>
</compile_context>

<pallas_src>
import math
import numpy as np
import jax
import jax.numpy as jnp
from jax import lax
from jax.experimental import pallas as pl
from jax.experimental.pallas import tpu as pltpu


def _round_up(x, m):
    return (x + m - 1) // m * m


# ------------------------------ fused kernel --------------------------------

def _make_ttconv_kernel(*, in_c_modes, out_c_modes, ranks_full, ksz, Wp, Ho, Lw):
    """Builds the fused (conv + TT chain) kernel for one batch element."""
    d = len(in_c_modes)
    M = [int(m) for m in in_c_modes]
    O = [int(o) for o in out_c_modes]
    Rk = [int(r) for r in ranks_full]          # length d+1, Rk[d] == 1
    in_c = int(np.prod(M))
    R0 = Rk[0]
    kk = ksz * ksz
    out_w = Ho * Wp                            # pitched spatial width stored to HBM
    T = [int(np.prod(M[i + 1:])) for i in range(d)]   # remaining input modes
    Bh = [int(np.prod(O[:i])) for i in range(d)]      # accumulated output modes
    tap_offsets = [kh * Wp + kw for kh in range(ksz) for kw in range(ksz)]

    def kernel(*refs):
        x_ref, w0_ref, b0_ref = refs[0], refs[1], refs[2]
        core_refs = refs[3:3 + d]
        o_ref = refs[3 + d]
        patch_ref = refs[4 + d]                # (in_c, k*k, Lw)
        u_refs = refs[5 + d:5 + 2 * d]         # TT-chain scratch buffers

        # ---- im2col: k*k shifted copies of the flat padded image, hoisted ONCE ----
        xv = x_ref[...]                                        # (in_c, Lin)
        for t, off in enumerate(tap_offsets):
            patch_ref[:, t, :] = xv[:, off:off + Lw]           # lane-dense rows

        # ---- core0 conv on the MXU: (R0, k*k) @ (k*k, Lw) per input channel ----
        w0 = w0_ref[...]                                       # (R0, k*k)
        b0 = b0_ref[...]                                       # (R0, 1)
        for c in range(in_c):
            conv_c = jnp.dot(w0, patch_ref[c],
                             preferred_element_type=jnp.float32) + b0
            m0, rest = c // T[0], c % T[0]
            u_refs[0][0,
                      m0 * R0:(m0 + 1) * R0,
                      rest * Lw:(rest + 1) * Lw] = conv_c

        # ---- fused TT-core chain: everything stays in VMEM ----
        # U_i layout: (batch over accumulated o-modes, (m_i, r_i) rows,
        #              (m_{i+1..}, spatial) lane-dense columns)
        for i in range(d):
            core = core_refs[i][...]           # cols pre-permuted to (m_i, r_i)
            for b_hist in range(Bh[i]):
                v = jnp.dot(core, u_refs[i][b_hist],
                            preferred_element_type=jnp.float32)
                if i + 1 < d:
                    wn = T[i + 1] * Lw
                    rn = Rk[i + 1]
                    for o in range(O[i]):
                        for m in range(M[i + 1]):
                            u_refs[i + 1][o * Bh[i] + b_hist,
                                          m * rn:(m + 1) * rn,
                                          :] = v[o * rn:(o + 1) * rn,
                                                 m * wn:(m + 1) * wn]
                else:
                    # map accumulated o-mode history -> reference channel base
                    base = 0
                    for j in range(d - 1):
                        o_j = (b_hist // Bh[j]) % O[j]
                        base += o_j * int(np.prod(O[j + 1:]))
                    o_ref[base:base + O[d - 1], :] = v[:, :out_w]

    return kernel


# ------------------------------ TTConv forward -------------------------------

def tt_conv_forward(X, w0, b0, cores, in_c_modes, out_c_modes, ranks,
                    stride=1, padding=0):
    # TODO(synk): stride > 1 not implemented in the Pallas kernel (module default is 1).
    assert stride == 1
    ranks_full = [int(r) for r in ranks] + [1]
    d = len(in_c_modes)
    B, in_c, H, W = X.shape
    assert in_c == int(np.prod(in_c_modes))
    out_c = int(np.prod(out_c_modes))
    R0 = ranks_full[0]
    ksz = int(w0.shape[-1])
    kk = ksz * ksz

    Hp, Wp = H + 2 * padding, W + 2 * padding
    Ho, Wo = Hp - ksz + 1, Wp - ksz + 1
    out_w = Ho * Wp

    Lw = _round_up(out_w, 128)                      # lane-dense working width
    off_max = (ksz - 1) * Wp + (ksz - 1)
    Lin = _round_up(Lw + off_max, 128)

    # Pad + flatten spatially in the wrapper (cheap; input is the smallest tensor).
    xp = jnp.pad(X.astype(jnp.float32),
                 ((0, 0), (0, 0), (padding, padding), (padding, padding)))
    x_flat = xp.reshape(B, in_c, Hp * Wp)
    x_flat = jnp.pad(x_flat, ((0, 0), (0, 0), (0, Lin - Hp * Wp)))

    w0_2d = w0.reshape(R0, kk).astype(jnp.float32)
    b0_col = b0.reshape(R0, 1).astype(jnp.float32)

    # Permute each core's columns from (r_i, m_i) to (m_i, r_i) so that the
    # in-kernel chain only ever needs contiguous block copies (no transposes).
    cores_perm = []
    for i in range(d):
        rows = int(out_c_modes[i]) * ranks_full[i + 1]
        ci = cores[i].astype(jnp.float32).reshape(rows, ranks_full[i],
                                                  int(in_c_modes[i]))
        cores_perm.append(jnp.transpose(ci, (0, 2, 1)).reshape(rows, -1))

    T = [int(np.prod(in_c_modes[i + 1:])) for i in range(d)]
    Bh = [int(np.prod(out_c_modes[:i])) for i in range(d)]

    kernel = _make_ttconv_kernel(
        in_c_modes=in_c_modes, out_c_modes=out_c_modes, ranks_full=ranks_full,
        ksz=ksz, Wp=Wp, Ho=Ho, Lw=Lw)

    in_specs = [
        pl.BlockSpec((None, in_c, Lin), lambda b: (b, 0, 0)),
        pl.BlockSpec((R0, kk), lambda b: (0, 0)),
        pl.BlockSpec((R0, 1), lambda b: (0, 0)),
    ]
    for i in range(d):
        in_specs.append(pl.BlockSpec(tuple(cores_perm[i].shape),
                                     lambda b: (0, 0)))

    out_spec = pl.BlockSpec((None, out_c, out_w), lambda b: (b, 0, 0))

    scratch_shapes = [pltpu.VMEM((in_c, kk, Lw), jnp.float32)]
    for i in range(d):
        scratch_shapes.append(
            pltpu.VMEM((Bh[i], int(in_c_modes[i]) * ranks_full[i], T[i] * Lw),
                       jnp.float32))

    out_flat = pl.pallas_call(
        kernel,
        out_shape=jax.ShapeDtypeStruct((B, out_c, out_w), jnp.float32),
        grid=(B,),
        in_specs=in_specs,
        out_specs=out_spec,
        scratch_shapes=scratch_shapes,
        compiler_params=pltpu.CompilerParams(
            dimension_semantics=("parallel",),
            vmem_limit_bytes=32 * 1024 * 1024),
    )(x_flat, w0_2d, b0_col, *cores_perm)

    # Drop the per-row pitch columns (w in [Wo, Wp)); reshape is metadata-only.
    out = out_flat.reshape(B, out_c, Ho, Wp)[:, :, :, :Wo]
    return out


# ------------------------- pure-JAX reference (torch) ------------------------

def tt_conv_reference(X, w0, b0, cores, in_c_modes, out_c_modes, ranks,
                      stride=1, padding=0):
    ranks_full = list(ranks) + [1]
    B, in_c, H, W = X.shape
    tmp = X.reshape(-1, 1, H, W)
    tmp = lax.conv_general_dilated(
        tmp, w0, window_strides=(stride, stride),
        padding=[(padding, padding), (padding, padding)],
        dimension_numbers=("NCHW", "OIHW", "NCHW"))
    tmp = tmp + b0.reshape(1, -1, 1, 1)
    Ho, Wo = tmp.shape[-2:]
    tmp = tmp.reshape(-1, in_c, ranks_full[0], Ho, Wo)
    tmp = jnp.swapaxes(tmp, 0, 2)
    for i in range(len(in_c_modes)):
        tmp = tmp.reshape(ranks_full[i] * in_c_modes[i], -1)
        tmp = cores[i] @ tmp
        tmp = tmp.reshape(out_c_modes[i], -1)
        tmp = tmp.T
    out_c = int(np.prod(out_c_modes))
    return tmp.reshape(-1, Ho, Wo, out_c).transpose(0, 3, 1, 2)


# ----------------------------------- main ------------------------------------

if __name__ == "__main__":
    in_c_modes = (2, 2)      # prod = in_c = 4
    out_c_modes = (2, 4)     # prod = out_c = 8
    ranks = (4, 3)           # internal ranks list becomes [4, 3, 1]
    ksz, stride, padding = 3, 1, 1
    B, in_c, H, W = 2, 4, 16, 16

    ranks_full = list(ranks) + [1]
    key = jax.random.PRNGKey(0)
    kx, kw, kb, kc = jax.random.split(key, 4)

    def xavier_normal(k_, shape, fan_in, fan_out):
        std = math.sqrt(2.0 / float(fan_in + fan_out))
        return std * jax.random.normal(k_, shape, dtype=jnp.float32)

    # core0 (Conv2d(1, r0, k)) weight + bias, deterministic init.
    w0 = xavier_normal(kw, (ranks_full[0], 1, ksz, ksz),
                       fan_in=1 * ksz * ksz, fan_out=ranks_full[0] * ksz * ksz)
    b0 = 0.05 * jax.random.normal(kb, (ranks_full[0],), dtype=jnp.float32)

    # TT core matrices: (out_c_modes[i]*ranks[i+1], ranks[i]*in_c_modes[i])
    core_keys = jax.random.split(kc, len(in_c_modes))
    cores = []
    for i in range(len(in_c_modes)):
        rows = out_c_modes[i] * ranks_full[i + 1]
        cols = ranks_full[i] * in_c_modes[i]
        cores.append(xavier_normal(core_keys[i], (rows, cols),
                                   fan_in=cols, fan_out=rows))

    X = jax.random.normal(kx, (B, in_c, H, W), dtype=jnp.float32)

    out = tt_conv_forward(X, w0, b0, cores, in_c_modes, out_c_modes, ranks,
                          stride=stride, padding=padding)
    out = jax.block_until_ready(out)

    ref = jax.block_until_ready(
        tt_conv_reference(X, w0, b0, cores, in_c_modes, out_c_modes, ranks,
                          stride=stride, padding=padding))

    assert out.shape == (B, int(np.prod(out_c_modes)), H, W), out.shape
    np.testing.assert_allclose(np.asarray(out), np.asarray(ref),
                               rtol=1e-3, atol=1e-3)
    print("KERNEL_OK")
</pallas_src>

<mosaic_0001>
module attributes {stable_mosaic.version = 11 : i64} {
  func.func @kernel(%arg0: i32, %arg1: memref<1x4x512xf32, #tpu.memory_space<vmem>>, %arg2: memref<4x9xf32, #tpu.memory_space<vmem>>, %arg3: memref<4x1xf32, #tpu.memory_space<vmem>>, %arg4: memref<6x8xf32, #tpu.memory_space<vmem>>, %arg5: memref<4x6xf32, #tpu.memory_space<vmem>>, %arg6: memref<1x8x288xf32, #tpu.memory_space<vmem>>, %arg7: memref<4x9x384xf32, #tpu.memory_space<vmem>>, %arg8: memref<1x8x768xf32, #tpu.memory_space<vmem>>, %arg9: memref<2x6x384xf32, #tpu.memory_space<vmem>>) attributes {dimension_semantics = [#tpu.dimension_semantics<parallel>], iteration_bounds = array<i64: 2>, scalar_prefetch = 0 : i64, scratch_operands = 3 : i64, tpu.core_type = #tpu.core_type<tc>, window_params = [{transform_indices = @transform_0, window_bounds = array<i64: 1, 4, 512>}, {pipeline_mode = #tpu.pipeline_mode<synchronous>, transform_indices = @transform_1, window_bounds = array<i64: 4, 9>}, {pipeline_mode = #tpu.pipeline_mode<synchronous>, transform_indices = @transform_2, window_bounds = array<i64: 4, 1>}, {pipeline_mode = #tpu.pipeline_mode<synchronous>, transform_indices = @transform_3, window_bounds = array<i64: 6, 8>}, {pipeline_mode = #tpu.pipeline_mode<synchronous>, transform_indices = @transform_4, window_bounds = array<i64: 4, 6>}, {transform_indices = @transform_5, window_bounds = array<i64: 1, 8, 288>}]} {
    %c0 = arith.constant 0 : index
    %c0_0 = arith.constant 0 : index
    %c0_1 = arith.constant 0 : index
    %0 = vector.load %arg1[%c0, %c0_0, %c0_1] : memref<1x4x512xf32, #tpu.memory_space<vmem>>, vector<1x4x512xf32>
    %1 = vector.shape_cast %0 : vector<1x4x512xf32> to vector<4x512xf32>
    %2 = vector.extract_strided_slice %1 {offsets = [0, 0], sizes = [4, 384], strides = [1, 1]} : vector<4x512xf32> to vector<4x384xf32>
    %c0_2 = arith.constant 0 : index
    %c0_3 = arith.constant 0 : index
    %c0_4 = arith.constant 0 : index
    %3 = vector.load %arg7[%c0_2, %c0_3, %c0_4] : memref<4x9x384xf32, #tpu.memory_space<vmem>>, vector<4x1x384xf32>
    %4 = vector.shape_cast %3 : vector<4x1x384xf32> to vector<4x384xf32>
    %5 = vector.shape_cast %2 : vector<4x384xf32> to vector<4x1x384xf32>
    tpu.vector_store %arg7[%c0_2, %c0_3, %c0_4], %5 {strides = array<i32>} : memref<4x9x384xf32, #tpu.memory_space<vmem>>, vector<4x1x384xf32>,
    %6 = vector.extract_strided_slice %1 {offsets = [0, 1], sizes = [4, 384], strides = [1, 1]} : vector<4x512xf32> to vector<4x384xf32>
    %c0_5 = arith.constant 0 : index
    %c1 = arith.constant 1 : index
    %c0_6 = arith.constant 0 : index
    %7 = vector.load %arg7[%c0_5, %c1, %c0_6] : memref<4x9x384xf32, #tpu.memory_space<vmem>>, vector<4x1x384xf32>
    %8 = vector.shape_cast %7 : vector<4x1x384xf32> to vector<4x384xf32>
    %9 = vector.shape_cast %6 : vector<4x384xf32> to vector<4x1x384xf32>
    tpu.vector_store %arg7[%c0_5, %c1, %c0_6], %9 {strides = array<i32>} : memref<4x9x384xf32, #tpu.memory_space<vmem>>, vector<4x1x384xf32>,
    %10 = vector.extract_strided_slice %1 {offsets = [0, 2], sizes = [4, 384], strides = [1, 1]} : vector<4x512xf32> to vector<4x384xf32>
    %c0_7 = arith.constant 0 : index
    %c2 = arith.constant 2 : index
    %c0_8 = arith.constant 0 : index
    %11 = vector.load %arg7[%c0_7, %c2, %c0_8] : memref<4x9x384xf32, #tpu.memory_space<vmem>>, vector<4x1x384xf32>
    %12 = vector.shape_cast %11 : vector<4x1x384xf32> to vector<4x384xf32>
    %13 = vector.shape_cast %10 : vector<4x384xf32> to vector<4x1x384xf32>
    tpu.vector_store %arg7[%c0_7, %c2, %c0_8], %13 {strides = array<i32>} : memref<4x9x384xf32, #tpu.memory_space<vmem>>, vector<4x1x384xf32>,
    %14 = vector.extract_strided_slice %1 {offsets = [0, 18], sizes = [4, 384], strides = [1, 1]} : vector<4x512xf32> to vector<4x384xf32>
    %c0_9 = arith.constant 0 : index
    %c3 = arith.constant 3 : index
    %c0_10 = arith.constant 0 : index
    %15 = vector.load %arg7[%c0_9, %c3, %c0_10] : memref<4x9x384xf32, #tpu.memory_space<vmem>>, vector<4x1x384xf32>
    %16 = vector.shape_cast %15 : vector<4x1x384xf32> to vector<4x384xf32>
    %17 = vector.shape_cast %14 : vector<4x384xf32> to vector<4x1x384xf32>
    tpu.vector_store %arg7[%c0_9, %c3, %c0_10], %17 {strides = array<i32>} : memref<4x9x384xf32, #tpu.memory_space<vmem>>, vector<4x1x384xf32>,
    %18 = vector.extract_strided_slice %1 {offsets = [0, 19], sizes = [4, 384], strides = [1, 1]} : vector<4x512xf32> to vector<4x384xf32>
    %c0_11 = arith.constant 0 : index
    %c4 = arith.constant 4 : index
    %c0_12 = arith.constant 0 : index
    %19 = vector.load %arg7[%c0_11, %c4, %c0_12] : memref<4x9x384xf32, #tpu.memory_space<vmem>>, vector<4x1x384xf32>
    %20 = vector.shape_cast %19 : vector<4x1x384xf32> to vector<4x384xf32>
    %21 = vector.shape_cast %18 : vector<4x384xf32> to vector<4x1x384xf32>
    tpu.vector_store %arg7[%c0_11, %c4, %c0_12], %21 {strides = array<i32>} : memref<4x9x384xf32, #tpu.memory_space<vmem>>, vector<4x1x384xf32>,
    %22 = vector.extract_strided_slice %1 {offsets = [0, 20], sizes = [4, 384], strides = [1, 1]} : vector<4x512xf32> to vector<4x384xf32>
    %c0_13 = arith.constant 0 : index
    %c5 = arith.constant 5 : index
    %c0_14 = arith.constant 0 : index
    %23 = vector.load %arg7[%c0_13, %c5, %c0_14] : memref<4x9x384xf32, #tpu.memory_space<vmem>>, vector<4x1x384xf32>
    %24 = vector.shape_cast %23 : vector<4x1x384xf32> to vector<4x384xf32>
    %25 = vector.shape_cast %22 : vector<4x384xf32> to vector<4x1x384xf32>
    tpu.vector_store %arg7[%c0_13, %c5, %c0_14], %25 {strides = array<i32>} : memref<4x9x384xf32, #tpu.memory_space<vmem>>, vector<4x1x384xf32>,
    %26 = vector.extract_strided_slice %1 {offsets = [0, 36], sizes = [4, 384], strides = [1, 1]} : vector<4x512xf32> to vector<4x384xf32>
    %c0_15 = arith.constant 0 : index
    %c6 = arith.constant 6 : index
    %c0_16 = arith.constant 0 : index
    %27 = vector.load %arg7[%c0_15, %c6, %c0_16] : memref<4x9x384xf32, #tpu.memory_space<vmem>>, vector<4x1x384xf32>
    %28 = vector.shape_cast %27 : vector<4x1x384xf32> to vector<4x384xf32>
    %29 = vector.shape_cast %26 : vector<4x384xf32> to vector<4x1x384xf32>
    tpu.vector_store %arg7[%c0_15, %c6, %c0_16], %29 {strides = array<i32>} : memref<4x9x384xf32, #tpu.memory_space<vmem>>, vector<4x1x384xf32>,
    %30 = vector.extract_strided_slice %1 {offsets = [0, 37], sizes = [4, 384], strides = [1, 1]} : vector<4x512xf32> to vector<4x384xf32>
    %c0_17 = arith.constant 0 : index
    %c7 = arith.constant 7 : index
    %c0_18 = arith.constant 0 : index
    %31 = vector.load %arg7[%c0_17, %c7, %c0_18] : memref<4x9x384xf32, #tpu.memory_space<vmem>>, vector<4x1x384xf32>
    %32 = vector.shape_cast %31 : vector<4x1x384xf32> to vector<4x384xf32>
    %33 = vector.shape_cast %30 : vector<4x384xf32> to vector<4x1x384xf32>
    tpu.vector_store %arg7[%c0_17, %c7, %c0_18], %33 {strides = array<i32>} : memref<4x9x384xf32, #tpu.memory_space<vmem>>, vector<4x1x384xf32>,
    %34 = vector.extract_strided_slice %1 {offsets = [0, 38], sizes = [4, 384], strides = [1, 1]} : vector<4x512xf32> to vector<4x384xf32>
    %c0_19 = arith.constant 0 : index
    %c8 = arith.constant 8 : index
    %c0_20 = arith.constant 0 : index
    %35 = vector.load %arg7[%c0_19, %c8, %c0_20] : memref<4x9x384xf32, #tpu.memory_space<vmem>>, vector<4x1x384xf32>
    %36 = vector.shape_cast %35 : vector<4x1x384xf32> to vector<4x384xf32>
    %37 = vector.shape_cast %34 : vector<4x384xf32> to vector<4x1x384xf32>
    tpu.vector_store %arg7[%c0_19, %c8, %c0_20], %37 {strides = array<i32>} : memref<4x9x384xf32, #tpu.memory_space<vmem>>, vector<4x1x384xf32>,
    %c0_21 = arith.constant 0 : index
    %c0_22 = arith.constant 0 : index
    %38 = vector.load %arg2[%c0_21, %c0_22] : memref<4x9xf32, #tpu.memory_space<vmem>>, vector<4x9xf32>
    %c0_23 = arith.constant 0 : index
    %c0_24 = arith.constant 0 : index
    %39 = vector.load %arg3[%c0_23, %c0_24] : memref<4x1xf32, #tpu.memory_space<vmem>>, vector<4x1xf32>
    %c0_25 = arith.constant 0 : index
    %c0_26 = arith.constant 0 : index
    %c0_27 = arith.constant 0 : index
    %40 = vector.load %arg7[%c0_25, %c0_26, %c0_27] : memref<4x9x384xf32, #tpu.memory_space<vmem>>, vector<1x9x384xf32>
    %41 = vector.shape_cast %40 : vector<1x9x384xf32> to vector<9x384xf32>
    %cst = arith.constant dense<0.000000e+00> : vector<4x384xf32>
    %42 = tpu.matmul %38, %41, %cst {dimension_numbers = #tpu.dot_dimension_numbers<[1], [0], [0], [1], [0, 0, 1, 1], [], []>} : vector<4x9xf32>, vector<9x384xf32>, vector<4x384xf32> -> vector<4x384xf32>
    %43 = vector.broadcast %39 : vector<4x1xf32> to vector<4x384xf32>
    %44 = arith.addf %42, %43 : vector<4x384xf32>
    %c0_28 = arith.constant 0 : index
    %c0_29 = arith.constant 0 : index
    %c0_30 = arith.constant 0 : index
    %45 = vector.load %arg8[%c0_28, %c0_29, %c0_30] : memref<1x8x768xf32, #tpu.memory_space<vmem>>, vector<1x4x384xf32>
    %46 = vector.shape_cast %45 : vector<1x4x384xf32> to vector<4x384xf32>
    %47 = vector.shape_cast %44 : vector<4x384xf32> to vector<1x4x384xf32>
    tpu.vector_store %arg8[%c0_28, %c0_29, %c0_30], %47 {strides = array<i32>} : memref<1x8x768xf32, #tpu.memory_space<vmem>>, vector<1x4x384xf32>,
    %c1_31 = arith.constant 1 : index
    %c0_32 = arith.constant 0 : index
    %c0_33 = arith.constant 0 : index
    %48 = vector.load %arg7[%c1_31, %c0_32, %c0_33] : memref<4x9x384xf32, #tpu.memory_space<vmem>>, vector<1x9x384xf32>
    %49 = vector.shape_cast %48 : vector<1x9x384xf32> to vector<9x384xf32>
    %cst_34 = arith.constant dense<0.000000e+00> : vector<4x384xf32>
    %50 = tpu.matmul %38, %49, %cst_34 {dimension_numbers = #tpu.dot_dimension_numbers<[1], [0], [0], [1], [0, 0, 1, 1], [], []>} : vector<4x9xf32>, vector<9x384xf32>, vector<4x384xf32> -> vector<4x384xf32>
    %51 = vector.broadcast %39 : vector<4x1xf32> to vector<4x384xf32>
    %52 = arith.addf %50, %51 : vector<4x384xf32>
    %c0_35 = arith.constant 0 : index
    %c0_36 = arith.constant 0 : index
    %c384 = arith.constant 384 : index
    %53 = vector.load %arg8[%c0_35, %c0_36, %c384] : memref<1x8x768xf32, #tpu.memory_space<vmem>>, vector<1x4x384xf32>
    %54 = vector.shape_cast %53 : vector<1x4x384xf32> to vector<4x384xf32>
    %55 = vector.shape_cast %52 : vector<4x384xf32> to vector<1x4x384xf32>
    tpu.vector_store %arg8[%c0_35, %c0_36, %c384], %55 {strides = array<i32>} : memref<1x8x768xf32, #tpu.memory_space<vmem>>, vector<1x4x384xf32>,
    %c2_37 = arith.constant 2 : index
    %c0_38 = arith.constant 0 : index
    %c0_39 = arith.constant 0 : index
    %56 = vector.load %arg7[%c2_37, %c0_38, %c0_39] : memref<4x9x384xf32, #tpu.memory_space<vmem>>, vector<1x9x384xf32>
    %57 = vector.shape_cast %56 : vector<1x9x384xf32> to vector<9x384xf32>
    %cst_40 = arith.constant dense<0.000000e+00> : vector<4x384xf32>
    %58 = tpu.matmul %38, %57, %cst_40 {dimension_numbers = #tpu.dot_dimension_numbers<[1], [0], [0], [1], [0, 0, 1, 1], [], []>} : vector<4x9xf32>, vector<9x384xf32>, vector<4x384xf32> -> vector<4x384xf32>
    %59 = vector.broadcast %39 : vector<4x1xf32> to vector<4x384xf32>
    %60 = arith.addf %58, %59 : vector<4x384xf32>
    %c0_41 = arith.constant 0 : index
    %c4_42 = arith.constant 4 : index
    %c0_43 = arith.constant 0 : index
    %61 = vector.load %arg8[%c0_41, %c4_42, %c0_43] : memref<1x8x768xf32, #tpu.memory_space<vmem>>, vector<1x4x384xf32>
    %62 = vector.shape_cast %61 : vector<1x4x384xf32> to vector<4x384xf32>
    %63 = vector.shape_cast %60 : vector<4x384xf32> to vector<1x4x384xf32>
    tpu.vector_store %arg8[%c0_41, %c4_42, %c0_43], %63 {strides = array<i32>} : memref<1x8x768xf32, #tpu.memory_space<vmem>>, vector<1x4x384xf32>,
    %c3_44 = arith.constant 3 : index
    %c0_45 = arith.constant 0 : index
    %c0_46 = arith.constant 0 : index
    %64 = vector.load %arg7[%c3_44, %c0_45, %c0_46] : memref<4x9x384xf32, #tpu.memory_space<vmem>>, vector<1x9x384xf32>
    %65 = vector.shape_cast %64 : vector<1x9x384xf32> to vector<9x384xf32>
    %cst_47 = arith.constant dense<0.000000e+00> : vector<4x384xf32>
    %66 = tpu.matmul %38, %65, %cst_47 {dimension_numbers = #tpu.dot_dimension_numbers<[1], [0], [0], [1], [0, 0, 1, 1], [], []>} : vector<4x9xf32>, vector<9x384xf32>, vector<4x384xf32> -> vector<4x384xf32>
    %67 = vector.broadcast %39 : vector<4x1xf32> to vector<4x384xf32>
    %68 = arith.addf %66, %67 : vector<4x384xf32>
    %c0_48 = arith.constant 0 : index
    %c4_49 = arith.constant 4 : index
    %c384_50 = arith.constant 384 : index
    %69 = vector.load %arg8[%c0_48, %c4_49, %c384_50] : memref<1x8x768xf32, #tpu.memory_space<vmem>>, vector<1x4x384xf32>
    %70 = vector.shape_cast %69 : vector<1x4x384xf32> to vector<4x384xf32>
    %71 = vector.shape_cast %68 : vector<4x384xf32> to vector<1x4x384xf32>
    tpu.vector_store %arg8[%c0_48, %c4_49, %c384_50], %71 {strides = array<i32>} : memref<1x8x768xf32, #tpu.memory_space<vmem>>, vector<1x4x384xf32>,
    %c0_51 = arith.constant 0 : index
    %c0_52 = arith.constant 0 : index
    %72 = vector.load %arg4[%c0_51, %c0_52] : memref<6x8xf32, #tpu.memory_space<vmem>>, vector<6x8xf32>
    %c0_53 = arith.constant 0 : index
    %c0_54 = arith.constant 0 : index
    %c0_55 = arith.constant 0 : index
    %73 = vector.load %arg8[%c0_53, %c0_54, %c0_55] : memref<1x8x768xf32, #tpu.memory_space<vmem>>, vector<1x8x768xf32>
    %74 = vector.shape_cast %73 : vector<1x8x768xf32> to vector<8x768xf32>
    %cst_56 = arith.constant dense<0.000000e+00> : vector<6x768xf32>
    %75 = tpu.matmul %72, %74, %cst_56 {dimension_numbers = #tpu.dot_dimension_numbers<[1], [0], [0], [1], [0, 0, 1, 1], [], []>} : vector<6x8xf32>, vector<8x768xf32>, vector<6x768xf32> -> vector<6x768xf32>
    %76 = vector.extract_strided_slice %75 {offsets = [0, 0], sizes = [3, 384], strides = [1, 1]} : vector<6x768xf32> to vector<3x384xf32>
    %c0_57 = arith.constant 0 : index
    %c0_58 = arith.constant 0 : index
    %c0_59 = arith.constant 0 : index
    %77 = vector.load %arg9[%c0_57, %c0_58, %c0_59] : memref<2x6x384xf32, #tpu.memory_space<vmem>>, vector<1x3x384xf32>
    %78 = vector.shape_cast %77 : vector<1x3x384xf32> to vector<3x384xf32>
    %79 = vector.shape_cast %76 : vector<3x384xf32> to vector<1x3x384xf32>
    tpu.vector_store %arg9[%c0_57, %c0_58, %c0_59], %79 {strides = array<i32>} : memref<2x6x384xf32, #tpu.memory_space<vmem>>, vector<1x3x384xf32>,
    %80 = vector.extract_strided_slice %75 {offsets = [0, 384], sizes = [3, 384], strides = [1, 1]} : vector<6x768xf32> to vector<3x384xf32>
    %c0_60 = arith.constant 0 : index
    %c3_61 = arith.constant 3 : index
    %c0_62 = arith.constant 0 : index
    %81 = vector.load %arg9[%c0_60, %c3_61, %c0_62] : memref<2x6x384xf32, #tpu.memory_space<vmem>>, vector<1x3x384xf32>
    %82 = vector.shape_cast %81 : vector<1x3x384xf32> to vector<3x384xf32>
    %83 = vector.shape_cast %80 : vector<3x384xf32> to vector<1x3x384xf32>
    tpu.vector_store %arg9[%c0_60, %c3_61, %c0_62], %83 {strides = array<i32>} : memref<2x6x384xf32, #tpu.memory_space<vmem>>, vector<1x3x384xf32>,
    %84 = vector.extract_strided_slice %75 {offsets = [3, 0], sizes = [3, 384], strides = [1, 1]} : vector<6x768xf32> to vector<3x384xf32>
    %c1_63 = arith.constant 1 : index
    %c0_64 = arith.constant 0 : index
    %c0_65 = arith.constant 0 : index
    %85 = vector.load %arg9[%c1_63, %c0_64, %c0_65] : memref<2x6x384xf32, #tpu.memory_space<vmem>>, vector<1x3x384xf32>
    %86 = vector.shape_cast %85 : vector<1x3x384xf32> to vector<3x384xf32>
    %87 = vector.shape_cast %84 : vector<3x384xf32> to vector<1x3x384xf32>
    tpu.vector_store %arg9[%c1_63, %c0_64, %c0_65], %87 {strides = array<i32>} : memref<2x6x384xf32, #tpu.memory_space<vmem>>, vector<1x3x384xf32>,
    %88 = vector.extract_strided_slice %75 {offsets = [3, 384], sizes = [3, 384], strides = [1, 1]} : vector<6x768xf32> to vector<3x384xf32>
    %c1_66 = arith.constant 1 : index
    %c3_67 = arith.constant 3 : index
    %c0_68 = arith.constant 0 : index
    %89 = vector.load %arg9[%c1_66, %c3_67, %c0_68] : memref<2x6x384xf32, #tpu.memory_space<vmem>>, vector<1x3x384xf32>
    %90 = vector.shape_cast %89 : vector<1x3x384xf32> to vector<3x384xf32>
    %91 = vector.shape_cast %88 : vector<3x384xf32> to vector<1x3x384xf32>
    tpu.vector_store %arg9[%c1_66, %c3_67, %c0_68], %91 {strides = array<i32>} : memref<2x6x384xf32, #tpu.memory_space<vmem>>, vector<1x3x384xf32>,
    %c0_69 = arith.constant 0 : index
    %c0_70 = arith.constant 0 : index
    %92 = vector.load %arg5[%c0_69, %c0_70] : memref<4x6xf32, #tpu.memory_space<vmem>>, vector<4x6xf32>
    %c0_71 = arith.constant 0 : index
    %c0_72 = arith.constant 0 : index
    %c0_73 = arith.constant 0 : index
    %93 = vector.load %arg9[%c0_71, %c0_72, %c0_73] : memref<2x6x384xf32, #tpu.memory_space<vmem>>, vector<1x6x384xf32>
    %94 = vector.shape_cast %93 : vector<1x6x384xf32> to vector<6x384xf32>
    %cst_74 = arith.constant dense<0.000000e+00> : vector<4x384xf32>
    %95 = tpu.matmul %92, %94, %cst_74 {dimension_numbers = #tpu.dot_dimension_numbers<[1], [0], [0], [1], [0, 0, 1, 1], [], []>} : vector<4x6xf32>, vector<6x384xf32>, vector<4x384xf32> -> vector<4x384xf32>
    %96 = vector.extract_strided_slice %95 {offsets = [0, 0], sizes = [4, 288], strides = [1, 1]} : vector<4x384xf32> to vector<4x288xf32>
    %c0_75 = arith.constant 0 : index
    %c0_76 = arith.constant 0 : index
    %c0_77 = arith.constant 0 : index
    %97 = vector.load %arg6[%c0_75, %c0_76, %c0_77] : memref<1x8x288xf32, #tpu.memory_space<vmem>>, vector<1x4x288xf32>
    %98 = vector.shape_cast %97 : vector<1x4x288xf32> to vector<4x288xf32>
    %99 = vector.shape_cast %96 : vector<4x288xf32> to vector<1x4x288xf32>
    tpu.vector_store %arg6[%c0_75, %c0_76, %c0_77], %99 {strides = array<i32>} : memref<1x8x288xf32, #tpu.memory_space<vmem>>, vector<1x4x288xf32>,
    %c1_78 = arith.constant 1 : index
    %c0_79 = arith.constant 0 : index
    %c0_80 = arith.constant 0 : index
    %100 = vector.load %arg9[%c1_78, %c0_79, %c0_80] : memref<2x6x384xf32, #tpu.memory_space<vmem>>, vector<1x6x384xf32>
    %101 = vector.shape_cast %100 : vector<1x6x384xf32> to vector<6x384xf32>
    %cst_81 = arith.constant dense<0.000000e+00> : vector<4x384xf32>
    %102 = tpu.matmul %92, %101, %cst_81 {dimension_numbers = #tpu.dot_dimension_numbers<[1], [0], [0], [1], [0, 0, 1, 1], [], []>} : vector<4x6xf32>, vector<6x384xf32>, vector<4x384xf32> -> vector<4x384xf32>
    %103 = vector.extract_strided_slice %102 {offsets = [0, 0], sizes = [4, 288], strides = [1, 1]} : vector<4x384xf32> to vector<4x288xf32>
    %c0_82 = arith.constant 0 : index
    %c4_83 = arith.constant 4 : index
    %c0_84 = arith.constant 0 : index
    %104 = vector.load %arg6[%c0_82, %c4_83, %c0_84] : memref<1x8x288xf32, #tpu.memory_space<vmem>>, vector<1x4x288xf32>
    %105 = vector.shape_cast %104 : vector<1x4x288xf32> to vector<4x288xf32>
    %106 = vector.shape_cast %103 : vector<4x288xf32> to vector<1x4x288xf32>
    tpu.vector_store %arg6[%c0_82, %c4_83, %c0_84], %106 {strides = array<i32>} : memref<1x8x288xf32, #tpu.memory_space<vmem>>, vector<1x4x288xf32>,
    return
  }
  func.func @transform_0(%arg0: i32) -> (i32, i32, i32) {
    %c0_i32 = arith.constant 0 : i32
    %c0_i32_0 = arith.constant 0 : i32
    %c0_i32_1 = arith.constant 0 : i32
    return %arg0, %c0_i32, %c0_i32_0 : i32, i32, i32
  }
  func.func @transform_1(%arg0: i32) -> (i32, i32) {
    %c0_i32 = arith.constant 0 : i32
    %c0_i32_0 = arith.constant 0 : i32
    %c0_i32_1 = arith.constant 0 : i32
    return %c0_i32, %c0_i32_0 : i32, i32
  }
  func.func @transform_2(%arg0: i32) -> (i32, i32) {
    %c0_i32 = arith.constant 0 : i32
    %c0_i32_0 = arith.constant 0 : i32
    %c0_i32_1 = arith.constant 0 : i32
    return %c0_i32, %c0_i32_0 : i32, i32
  }
  func.func @transform_3(%arg0: i32) -> (i32, i32) {
    %c0_i32 = arith.constant 0 : i32
    %c0_i32_0 = arith.constant 0 : i32
    %c0_i32_1 = arith.constant 0 : i32
    return %c0_i32, %c0_i32_0 : i32, i32
  }
  func.func @transform_4(%arg0: i32) -> (i32, i32) {
    %c0_i32 = arith.constant 0 : i32
    %c0_i32_0 = arith.constant 0 : i32
    %c0_i32_1 = arith.constant 0 : i32
    return %c0_i32, %c0_i32_0 : i32, i32
  }
  func.func @transform_5(%arg0: i32) -> (i32, i32, i32) {
    %c0_i32 = arith.constant 0 : i32
    %c0_i32_0 = arith.constant 0 : i32
    %c0_i32_1 = arith.constant 0 : i32
    return %arg0, %c0_i32, %c0_i32_0 : i32, i32, i32
  }
}

</mosaic_0001>

<llo_original>
// kernel: tpu_custom_call.1
$region0: #{tpu_custom_call.1}
  #allocation0 [shape = 'u32[]', space=smem, size = 0x4, offset = 0x4, fixed_abs, tag = 'smem constant byte address 0x4 - core index']
  #allocation1 [shape = 'u32[72,128]{1,0:T(1,128)}', space=vmem, size = 0x9000, scoped, tag = 'internal scratch']
  #allocation2 [shape = 'f32[4,9,384]{2,1,0:T(8,128)}', space=vmem, size = 0x18000, scoped, tag = 'scratch operand']
  #allocation3 [shape = 'f32[1,8,768]{2,1,0:T(8,128)}', space=vmem, size = 0x6000, scoped, tag = 'scratch operand']
  #allocation4 [shape = 'f32[2,6,384]{2,1,0:T(8,128)}', space=vmem, size = 0x6000, scoped, tag = 'scratch operand']
  %s0 = inlined_call_operand.hbm [shape: f32[2,4,512], index: 0, kind: input, shape index: {}]
  %s1 = inlined_call_operand.vmem [shape: f32[4,9], index: 1, kind: input, shape index: {}]
  %s2 = inlined_call_operand.vmem [shape: f32[4,1], index: 2, kind: input, shape index: {}]
  %s3 = inlined_call_operand.hbm [shape: f32[6,8], index: 3, kind: input, shape index: {}]
  %s4 = inlined_call_operand.hbm [shape: f32[4,6], index: 4, kind: input, shape index: {}]
  %s5 = inlined_call_operand.hbm [shape: f32[2,8,288], index: 5, kind: output, shape index: {}]
  %s6 = sld [smem:[#allocation0]]
  $region65: #{tpu_custom_call.1} parent=0
    _
  %s8 = ssub.s32 1, %s6
  %s9 = scalar_select 0, %s8, %s6
  $region1: #{tpu_custom_call.1} parent=0
    #allocation5 [shape = 'u8[16384]{0}', space=vmem, size = 0x4000, scoped, tag = 'input window, operand 0']
    #allocation6 [shape = 's32[2]{0}', space=sflag, size = 0x8, scoped, tag = 'scoped memory for tpu_custom_call.1']
    #allocation7 [shape = 's32[2]{0}', space=sflag, size = 0x8, scoped, tag = 'scoped memory for tpu_custom_call.1']
    #allocation8 [shape = 'u8[4096]{0}', space=vmem, size = 0x1000, scoped, tag = 'input window, operand 3, single buffered']
    #allocation9 [shape = 's32[1]{0}', space=sflag, size = 0x4, scoped, tag = 'scoped memory for tpu_custom_call.1']
    #allocation10 [shape = 'u8[2048]{0}', space=vmem, size = 0x800, scoped, tag = 'input window, operand 4, single buffered']
    #allocation11 [shape = 'u8[24576]{0}', space=vmem, size = 0x6000, scoped, tag = 'output window, operand 0']
    %10 = vsyncpa [#allocation6], 0
    %s11 = scalar_lea.sflag [#allocation6], 1
    %12 = vsyncpa %s11, 0
    %13 = vsyncpa [#allocation9], 0
    %14 = vsyncpa [#allocation7], 0
    %s15 = scalar_lea.sflag [#allocation7], 1
    %16 = vsyncpa %s15, 0
    loop: start=0, step=1, limit=4
    $region2: #{tpu_custom_call.1} parent=1 // loop_pre_header
      _
    $region3: #{tpu_custom_call.1} parent=1 // loop_header
      %s18 = sphi 0, %s22
      %p19 = scmp.ge.s32.totalorder %s18, 4
      %s28 = sphi 0, %s30
      %s31 = sphi 0, %s28
      %s32 = sphi 0, %s31
      %s48 = sphi 0, %s32
      %s52 = sphi 0, %s52
      %s54 = sphi 0, %s52
      %s55 = sphi 0, %s54
      %s69 = sphi 0, %s55
      %s73 = sphi 0, %s73
      %s75 = sphi 0, %s73
      %s76 = sphi 0, %s75
      %s90 = sphi 0, %s76
      %s94 = sphi 0, %s94
      %s96 = sphi 0, %s94
      %s97 = sphi 0, %s96
      %s111 = sphi 0, %s97
      %s115 = sphi 0, %s115
      %s117 = sphi 0, %s115
      %s118 = sphi 0, %s117
      %s132 = sphi 0, %s118
      %s138 = sphi 0, %s140
      %s141 = sphi 0, %s138
      %s142 = sphi 0, %s141
      %s158 = sphi 0, %s142
    $region4: #{tpu_custom_call.1} parent=1 // loop_header_branch
      %21 = sbr.rel (%p19) target = $region8
    $region5: #{tpu_custom_call.1} parent=1 // loop_body
      %s23 = ssub.s32 %s18, 1
      %s24 = ssub.s32 %s18, 2
      %s25 = sadd.s32 %s18, 1
      %s26 = ssub.s32 %s18, %s25
      %p27 = scmp.eq.s32.totalorder %s26, 0
      %s29 = sadd.s32 %s28, 1
      %s30 = scalar_select %p27, %s28, %s29
      %p33 = pneg %p27
      %p34 = scmp.eq.s32.totalorder %s18, 1
      %p35 = por %p33, %p34
      %p36 = scmp.ne.s32.totalorder %s28, %s31
      %p37 = scmp.eq.s32.totalorder %s18, 0
      %p38 = por %p36, %p37
      %p39 = scmp.ne.s32.totalorder %s28, %s31
      %p40 = scmp.eq.s32.totalorder %s23, 1
      %p41 = por %p39, %p40
      %p42 = scmp.ne.s32.totalorder %s31, %s32
      %p43 = scmp.eq.s32.totalorder %s23, 0
      %p44 = por %p42, %p43
      %p45 = scmp.ne.s32.totalorder %s31, %s32
      %p46 = scmp.eq.s32.totalorder %s24, 1
      %p47 = por %p45, %p46
      %p49 = scmp.ne.s32.totalorder %s32, %s48
      %p50 = scmp.eq.s32.totalorder %s24, 0
      %p51 = por %p49, %p50
      %s53 = sadd.s32 %s52, 1
      %p56 = scmp.eq.s32.totalorder %s18, 1
      %p57 = scmp.ne.s32.totalorder %s52, %s54
      %p58 = scmp.eq.s32.totalorder %s18, 0
      %p59 = por %p57, %p58
      %p60 = scmp.ne.s32.totalorder %s52, %s54
      %p61 = scmp.eq.s32.totalorder %s23, 1
      %p62 = por %p60, %p61
      %p63 = scmp.ne.s32.totalorder %s54, %s55
      %p64 = scmp.eq.s32.totalorder %s23, 0
      %p65 = por %p63, %p64
      %p66 = scmp.ne.s32.totalorder %s54, %s55
      %p67 = scmp.eq.s32.totalorder %s24, 1
      %p68 = por %p66, %p67
      %p70 = scmp.ne.s32.totalorder %s55, %s69
      %p71 = scmp.eq.s32.totalorder %s24, 0
      %p72 = por %p70, %p71
      %s74 = sadd.s32 %s73, 1
      %p77 = scmp.eq.s32.totalorder %s18, 1
      %p78 = scmp.ne.s32.totalorder %s73, %s75
      %p79 = scmp.eq.s32.totalorder %s18, 0
      %p80 = por %p78, %p79
      %p81 = scmp.ne.s32.totalorder %s73, %s75
      %p82 = scmp.eq.s32.totalorder %s23, 1
      %p83 = por %p81, %p82
      %p84 = scmp.ne.s32.totalorder %s75, %s76
      %p85 = scmp.eq.s32.totalorder %s23, 0
      %p86 = por %p84, %p85
      %p87 = scmp.ne.s32.totalorder %s75, %s76
      %p88 = scmp.eq.s32.totalorder %s24, 1
      %p89 = por %p87, %p88
      %p91 = scmp.ne.s32.totalorder %s76, %s90
      %p92 = scmp.eq.s32.totalorder %s24, 0
      %p93 = por %p91, %p92
      %s95 = sadd.s32 %s94, 1
      %p98 = scmp.eq.s32.totalorder %s18, 1
      %p99 = scmp.ne.s32.totalorder %s94, %s96
      %p100 = scmp.eq.s32.totalorder %s18, 0
      %p101 = por %p99, %p100
      %p102 = scmp.ne.s32.totalorder %s94, %s96
      %p103 = scmp.eq.s32.totalorder %s23, 1
      %p104 = por %p102, %p103
      %p105 = scmp.ne.s32.totalorder %s96, %s97
      %p106 = scmp.eq.s32.totalorder %s23, 0
      %p107 = por %p105, %p106
      %p108 = scmp.ne.s32.totalorder %s96, %s97
      %p109 = scmp.eq.s32.totalorder %s24, 1
      %p110 = por %p108, %p109
      %p112 = scmp.ne.s32.totalorder %s97, %s111
      %p113 = scmp.eq.s32.totalorder %s24, 0
      %p114 = por %p112, %p113
      %s116 = sadd.s32 %s115, 1
      %p119 = scmp.eq.s32.totalorder %s18, 1
      %p120 = scmp.ne.s32.totalorder %s115, %s117
      %p121 = scmp.eq.s32.totalorder %s18, 0
      %p122 = por %p120, %p121
      %p123 = scmp.ne.s32.totalorder %s115, %s117
      %p124 = scmp.eq.s32.totalorder %s23, 1
      %p125 = por %p123, %p124
      %p126 = scmp.ne.s32.totalorder %s117, %s118
      %p127 = scmp.eq.s32.totalorder %s23, 0
      %p128 = por %p126, %p127
      %p129 = scmp.ne.s32.totalorder %s117, %s118
      %p130 = scmp.eq.s32.totalorder %s24, 1
      %p131 = por %p129, %p130
      %p133 = scmp.ne.s32.totalorder %s118, %s132
      %p134 = scmp.eq.s32.totalorder %s24, 0
      %p135 = por %p133, %p134
      %s136 = ssub.s32 %s18, %s25
      %p137 = scmp.eq.s32.totalorder %s136, 0
      %s139 = sadd.s32 %s138, 1
      %s140 = scalar_select %p137, %s138, %s139
      %p143 = pneg %p137
      %p144 = scmp.eq.s32.totalorder %s18, 1
      %p145 = por %p143, %p144
      %p146 = scmp.ne.s32.totalorder %s138, %s141
      %p147 = scmp.eq.s32.totalorder %s18, 0
      %p148 = por %p146, %p147
      %p149 = scmp.ne.s32.totalorder %s138, %s141
      %p150 = scmp.eq.s32.totalorder %s23, 1
      %p151 = por %p149, %p150
      %p152 = scmp.ne.s32.totalorder %s141, %s142
      %p153 = scmp.eq.s32.totalorder %s23, 0
      %p154 = por %p152, %p153
      %p155 = scmp.ne.s32.totalorder %s141, %s142
      %p156 = scmp.eq.s32.totalorder %s24, 1
      %p157 = por %p155, %p156
      %p159 = scmp.ne.s32.totalorder %s142, %s158
      %p160 = scmp.eq.s32.totalorder %s24, 0
      %p161 = por %p159, %p160
      %p162 = scmp.le.s32.totalorder 1, %s18
      %p163 = scmp.lt.s32.totalorder %s18, 3
      %p164 = pnand %p162, %p163
      %p165 = pneg %p164
      // Predicated region
      $region9: #{tpu_custom_call.1} parent=5 // pred_check
        _
      $region10: #{tpu_custom_call.1} parent=5 // pred_check_branch
        %167 = sbr.rel (%p164) target = $region12
      $region11: #{tpu_custom_call.1} parent=5 // pred_region
        %s168 = ssub.s32 %s18, 1
        // Predicated region
        $region13: #{tpu_custom_call.1} parent=11 // pred_check
          %p169 = pneg %p65
        $region14: #{tpu_custom_call.1} parent=11 // pred_check_branch
          %171 = sbr.rel (%p169) target = $region16
        $region15: #{tpu_custom_call.1} parent=11 // pred_region
          _
        $region16: #{tpu_custom_call.1} parent=11 // pred_fallthru
          _
        // Predicated region
        $region17: #{tpu_custom_call.1} parent=11 // pred_check
          %p172 = pneg %p86
        $region18: #{tpu_custom_call.1} parent=11 // pred_check_branch
          %174 = sbr.rel (%p172) target = $region20
        $region19: #{tpu_custom_call.1} parent=11 // pred_region
          _
        $region20: #{tpu_custom_call.1} parent=11 // pred_fallthru
          _
        // Predicated region
        $region21: #{tpu_custom_call.1} parent=11 // pred_check
          %p175 = pneg %p107
        $region22: #{tpu_custom_call.1} parent=11 // pred_check_branch
          %177 = sbr.rel (%p175) target = $region24
        $region23: #{tpu_custom_call.1} parent=11 // pred_region
          %179 = vsyncadd [#allocation9], 0
          %s181 = sshll.u32 %s3, 4
          %s182 = int_to_ptr.hbm [resolvable:$true] %s181
          %s183 = sshll.u32 [#allocation8], 4
          %s184 = int_to_ptr.vmem [resolvable:$true] %s183
          %186 = dma.hbm_to_vmem [thread:$0]  %s182, 128, %s184, [#allocation9]
        $region24: #{tpu_custom_call.1} parent=11 // pred_fallthru
          _
        // Predicated region
        $region25: #{tpu_custom_call.1} parent=11 // pred_check
          %p187 = pneg %p128
        $region26: #{tpu_custom_call.1} parent=11 // pred_check_branch
          %189 = sbr.rel (%p187) target = $region28
        $region27: #{tpu_custom_call.1} parent=11 // pred_region
          %191 = vsyncadd [#allocation9], 0
          %s193 = sshll.u32 %s4, 4
          %s194 = int_to_ptr.hbm [resolvable:$true] %s193
          %s195 = sshll.u32 [#allocation10], 4
          %s196 = int_to_ptr.vmem [resolvable:$true] %s195
          %198 = dma.hbm_to_vmem [thread:$0]  %s194, 64, %s196, [#allocation9]
        $region28: #{tpu_custom_call.1} parent=11 // pred_fallthru
          _
      $region12: #{tpu_custom_call.1} parent=5 // pred_fallthru
        _
      %p199 = scmp.lt.s32.totalorder %s18, 2
      // Predicated region
      $region29: #{tpu_custom_call.1} parent=5 // pred_check
        %p200 = pneg %p199
      $region30: #{tpu_custom_call.1} parent=5 // pred_check_branch
        %202 = sbr.rel (%p200) target = $region32
      $region31: #{tpu_custom_call.1} parent=5 // pred_region
        // Predicated region
        $region33: #{tpu_custom_call.1} parent=31 // pred_check
          %p203 = pneg %p38
        $region34: #{tpu_custom_call.1} parent=31 // pred_check_branch
          %205 = sbr.rel (%p203) target = $region36
        $region35: #{tpu_custom_call.1} parent=31 // pred_region
          %s206 = sand.u32 %s28, 1
          %s207 = scalar_lea.sflag [#allocation6], %s206
          %s208 = sand.u32 %s28, 1
          %s209 = smul.addr %s208, 16
          %s210 = scalar_lea.vmem [#allocation5], %s209
          %212 = vsyncadd %s207, 0
          %s213 = smul.addr %s18, 4
          %s214 = smul.addr %s213, 4
          %s215 = scalar_lea.hbm %s0, %s214
          %s217 = sshll.u32 %s215, 4
          %s218 = int_to_ptr.hbm [resolvable:$true] %s217
          %s219 = sshll.u32 %s210, 4
          %s220 = int_to_ptr.vmem [resolvable:$true] %s219
          %222 = dma.hbm_to_vmem [thread:$0]  %s218, 256, %s220, %s207
        $region36: #{tpu_custom_call.1} parent=31 // pred_fallthru
          _
      $region32: #{tpu_custom_call.1} parent=5 // pred_fallthru
        _
      %p223 = scmp.le.s32.totalorder 1, %s18
      %p224 = scmp.lt.s32.totalorder %s18, 3
      %p225 = pnand %p223, %p224
      %p226 = pneg %p225
      // Predicated region
      $region37: #{tpu_custom_call.1} parent=5 // pred_check
        _
      $region38: #{tpu_custom_call.1} parent=5 // pred_check_branch
        %228 = sbr.rel (%p225) target = $region40
      $region39: #{tpu_custom_call.1} parent=5 // pred_region
        %s229 = ssub.s32 %s18, 1
        %s230 = sand.u32 %s31, 1
        %s231 = scalar_lea.sflag [#allocation6], %s230
        %s232 = sand.u32 %s31, 1
        %s233 = smul.addr %s232, 16
        %s234 = scalar_lea.vmem [#allocation5], %s233
        // Predicated region
        $region41: #{tpu_custom_call.1} parent=39 // pred_check
          %p235 = pneg %p44
        $region42: #{tpu_custom_call.1} parent=39 // pred_check_branch
          %237 = sbr.rel (%p235) target = $region44
        $region43: #{tpu_custom_call.1} parent=39 // pred_region
          %239 = dma.done %s231, 256
        $region44: #{tpu_custom_call.1} parent=39 // pred_fallthru
          _
        // Predicated region
        $region45: #{tpu_custom_call.1} parent=39 // pred_check
          %p240 = pneg %p107
        $region46: #{tpu_custom_call.1} parent=39 // pred_check_branch
          %242 = sbr.rel (%p240) target = $region48
        $region47: #{tpu_custom_call.1} parent=39 // pred_region
          %244 = dma.done [#allocation9], 128
        $region48: #{tpu_custom_call.1} parent=39 // pred_fallthru
          _
        // Predicated region
        $region49: #{tpu_custom_call.1} parent=39 // pred_check
          %p245 = pneg %p128
        $region50: #{tpu_custom_call.1} parent=39 // pred_check_branch
          %247 = sbr.rel (%p245) target = $region52
        $region51: #{tpu_custom_call.1} parent=39 // pred_region
          %249 = dma.done [#allocation9], 64
        $region52: #{tpu_custom_call.1} parent=39 // pred_fallthru
          _
        %s250 = sand.u32 %s31, 1
        %s251 = scalar_lea.sflag [#allocation6], %s250
        %s252 = sand.u32 %s31, 1
        %s253 = smul.addr %s252, 16
        %s254 = scalar_lea.vmem [#allocation5], %s253
        %p255 = pneg %p44
        %p256 = pneg %p41
        %p257 = pneg %p65
        %p258 = pneg %p62
        %p259 = pneg %p86
        %p260 = pneg %p83
        %p261 = pneg %p107
        %p262 = pneg %p104
        %p263 = pneg %p128
        %p264 = pneg %p125
        %p265 = pneg %p154
        %p266 = pneg %p151
        %s267 = sand.u32 %s141, 1
        %s268 = scalar_lea.sflag [#allocation7], %s267
        %s269 = sand.u32 %s141, 1
        %s270 = smul.addr %s269, 24
        %s271 = scalar_lea.vmem [#allocation11], %s270
        %v272 = vld [vmem:[%s234] sm:$0xff]
        %v273 = vld [vmem:[%s234 + $0x8] sm:$0xff]
        %v276 = vrot.slane %v272, 3
        %v277 = vrot.slane %v273, 6
        %v278 = vrot.slane %v273, 1
        %vm279 = vcmask 1040384
        %v280 = vsel %vm279, %v272, %v276
        %vm281 = vcmask 1042434
        %v282 = vsel %vm281, %v277, %v278
        %vm283 = vcmask 1041408
        %v284 = vsel %vm283, %v280, %v282
        %vm285 = vcmask 1041409
        %v286 = vsel %vm285, %v272, %v276
        %vm287 = vcmask 1043459
        %v288 = vsel %vm287, %v277, %v278
        %vm289 = vcmask 1042433
        %v290 = vsel %vm289, %v286, %v288
        %v291 = vrot.slane %v290, 1
        %v292 = vsel %vm281, %v272, %v276
        %vm293 = vcmask 1044484
        %v294 = vsel %vm293, %v277, %v278
        %vm295 = vcmask 1043458
        %v296 = vsel %vm295, %v292, %v294
        %v297 = vrot.slane %v296, 2
        %v298 = vsel %vm287, %v272, %v276
        %vm299 = vcmask 1045509
        %v300 = vsel %vm299, %v277, %v278
        %vm301 = vcmask 1044483
        %v302 = vsel %vm301, %v298, %v300
        %v303 = vrot.slane %v302, 3
        %v308 = vlaneseq
        %vm309 = vcmp.ge.s32.totalorder %v308, 0
        %vm310 = vcmp.lt.s32.totalorder %v308, 384
        %vm311 = vmand %vm309, %vm310
        %312 = vst.msk [vmem:[#allocation2] ss:$8 sm:$0x7] %vm311, %v284
        %313 = vst.msk [vmem:[#allocation2] ss:$8 sm:$0x0] %vm311, %v284
        %s314 = scalar_lea.vmem [#allocation2], 48
        %315 = vst.msk [vmem:[%s314] ss:$8 sm:$0x7] %vm311, %v291
        %316 = vst.msk [vmem:[%s314] ss:$8 sm:$0x0] %vm311, %v291
        %s317 = scalar_lea.vmem [#allocation2], 96
        %318 = vst.msk [vmem:[%s317] ss:$8 sm:$0x7] %vm311, %v297
        %319 = vst.msk [vmem:[%s317] ss:$8 sm:$0x0] %vm311, %v297
        %s320 = scalar_lea.vmem [#allocation2], 144
        %321 = vst.msk [vmem:[%s320] ss:$8 sm:$0x7] %vm311, %v303
        %322 = vst.msk [vmem:[%s320] ss:$8 sm:$0x0] %vm311, %v303
        %323 = vrot.lane.b32.xlu0 %v284, 127
        %v324 = vpop.permute.xlu0 %323
        %325 = vrot.lane.b32.xlu0 %v291, 127
        %v326 = vpop.permute.xlu0 %325
        %327 = vrot.lane.b32.xlu0 %v297, 127
        %v328 = vpop.permute.xlu0 %327
        %329 = vrot.lane.b32.xlu0 %v303, 127
        %v330 = vpop.permute.xlu0 %329
        %v331 = vrot.slane %v324, 1
        %v332 = vrot.slane %v326, 1
        %v333 = vrot.slane %v328, 1
        %v334 = vrot.slane %v330, 1
        %vm335 = vcmask 1039360
        %v336 = vsel %vm335, %v324, %v331
        %v337 = vsel %vm335, %v326, %v332
        %v338 = vsel %vm335, %v328, %v333
        %v339 = vsel %vm335, %v330, %v334
        %s344 = scalar_lea.vmem [#allocation2], 1
        %345 = vst.msk [vmem:[%s344] ss:$8 sm:$0x7] %vm311, %v336
        %346 = vst.msk [vmem:[%s344] ss:$8 sm:$0x0] %vm311, %v336
        %s347 = scalar_lea.vmem [#allocation2], 49
        %348 = vst.msk [vmem:[%s347] ss:$8 sm:$0x7] %vm311, %v337
        %349 = vst.msk [vmem:[%s347] ss:$8 sm:$0x0] %vm311, %v337
        %s350 = scalar_lea.vmem [#allocation2], 97
        %351 = vst.msk [vmem:[%s350] ss:$8 sm:$0x7] %vm311, %v338
        %352 = vst.msk [vmem:[%s350] ss:$8 sm:$0x0] %vm311, %v338
        %s353 = scalar_lea.vmem [#allocation2], 145
        %354 = vst.msk [vmem:[%s353] ss:$8 sm:$0x7] %vm311, %v339
        %355 = vst.msk [vmem:[%s353] ss:$8 sm:$0x0] %vm311, %v339
        %356 = vrot.lane.b32.xlu0 %v284, 126
        %v357 = vpop.permute.xlu0 %356
        %358 = vrot.lane.b32.xlu0 %v291, 126
        %v359 = vpop.permute.xlu0 %358
        %360 = vrot.lane.b32.xlu0 %v297, 126
        %v361 = vpop.permute.xlu0 %360
        %362 = vrot.lane.b32.xlu0 %v303, 126
        %v363 = vpop.permute.xlu0 %362
        %v364 = vrot.slane %v357, 1
        %v365 = vrot.slane %v359, 1
        %v366 = vrot.slane %v361, 1
        %v367 = vrot.slane %v363, 1
        %vm368 = vcmask 1031168
        %v369 = vsel %vm368, %v357, %v364
        %v370 = vsel %vm368, %v359, %v365
        %v371 = vsel %vm368, %v361, %v366
        %v372 = vsel %vm368, %v363, %v367
        %s377 = scalar_lea.vmem [#allocation2], 2
        %378 = vst.msk [vmem:[%s377] ss:$8 sm:$0x7] %vm311, %v369
        %379 = vst.msk [vmem:[%s377] ss:$8 sm:$0x0] %vm311, %v369
        %s380 = scalar_lea.vmem [#allocation2], 50
        %381 = vst.msk [vmem:[%s380] ss:$8 sm:$0x7] %vm311, %v370
        %382 = vst.msk [vmem:[%s380] ss:$8 sm:$0x0] %vm311, %v370
        %s383 = scalar_lea.vmem [#allocation2], 98
        %384 = vst.msk [vmem:[%s383] ss:$8 sm:$0x7] %vm311, %v371
        %385 = vst.msk [vmem:[%s383] ss:$8 sm:$0x0] %vm311, %v371
        %s386 = scalar_lea.vmem [#allocation2], 146
        %387 = vst.msk [vmem:[%s386] ss:$8 sm:$0x7] %vm311, %v372
        %388 = vst.msk [vmem:[%s386] ss:$8 sm:$0x0] %vm311, %v372
        %389 = vrot.lane.b32.xlu0 %v284, 110
        %v390 = vpop.permute.xlu0 %389
        %391 = vrot.lane.b32.xlu0 %v291, 110
        %v392 = vpop.permute.xlu0 %391
        %393 = vrot.lane.b32.xlu0 %v297, 110
        %v394 = vpop.permute.xlu0 %393
        %395 = vrot.lane.b32.xlu0 %v303, 110
        %v396 = vpop.permute.xlu0 %395
        %v397 = vrot.slane %v390, 1
        %v398 = vrot.slane %v392, 1
        %v399 = vrot.slane %v394, 1
        %v400 = vrot.slane %v396, 1
        %vm401 = vcmask 900096
        %v402 = vsel %vm401, %v390, %v397
        %v403 = vsel %vm401, %v392, %v398
        %v404 = vsel %vm401, %v394, %v399
        %v405 = vsel %vm401, %v396, %v400
        %s410 = scalar_lea.vmem [#allocation2], 3
        %411 = vst.msk [vmem:[%s410] ss:$8 sm:$0x7] %vm311, %v402
        %412 = vst.msk [vmem:[%s410] ss:$8 sm:$0x0] %vm311, %v402
        %s413 = scalar_lea.vmem [#allocation2], 51
        %414 = vst.msk [vmem:[%s413] ss:$8 sm:$0x7] %vm311, %v403
        %415 = vst.msk [vmem:[%s413] ss:$8 sm:$0x0] %vm311, %v403
        %s416 = scalar_lea.vmem [#allocation2], 99
        %417 = vst.msk [vmem:[%s416] ss:$8 sm:$0x7] %vm311, %v404
        %418 = vst.msk [vmem:[%s416] ss:$8 sm:$0x0] %vm311, %v404
        %s419 = scalar_lea.vmem [#allocation2], 147
        %420 = vst.msk [vmem:[%s419] ss:$8 sm:$0x7] %vm311, %v405
        %421 = vst.msk [vmem:[%s419] ss:$8 sm:$0x0] %vm311, %v405
        %422 = vrot.lane.b32.xlu0 %v284, 109
        %v423 = vpop.permute.xlu0 %422
        %424 = vrot.lane.b32.xlu0 %v291, 109
        %v425 = vpop.permute.xlu0 %424
        %426 = vrot.lane.b32.xlu0 %v297, 109
        %v427 = vpop.permute.xlu0 %426
        %428 = vrot.lane.b32.xlu0 %v303, 109
        %v429 = vpop.permute.xlu0 %428
        %v430 = vrot.slane %v423, 1
        %v431 = vrot.slane %v425, 1
        %v432 = vrot.slane %v427, 1
        %v433 = vrot.slane %v429, 1
        %vm434 = vcmask 891904
        %v435 = vsel %vm434, %v423, %v430
        %v436 = vsel %vm434, %v425, %v431
        %v437 = vsel %vm434, %v427, %v432
        %v438 = vsel %vm434, %v429, %v433
        %s443 = scalar_lea.vmem [#allocation2], 4
        %444 = vst.msk [vmem:[%s443] ss:$8 sm:$0x7] %vm311, %v435
        %445 = vst.msk [vmem:[%s443] ss:$8 sm:$0x0] %vm311, %v435
        %s446 = scalar_lea.vmem [#allocation2], 52
        %447 = vst.msk [vmem:[%s446] ss:$8 sm:$0x7] %vm311, %v436
        %448 = vst.msk [vmem:[%s446] ss:$8 sm:$0x0] %vm311, %v436
        %s449 = scalar_lea.vmem [#allocation2], 100
        %450 = vst.msk [vmem:[%s449] ss:$8 sm:$0x7] %vm311, %v437
        %451 = vst.msk [vmem:[%s449] ss:$8 sm:$0x0] %vm311, %v437
        %s452 = scalar_lea.vmem [#allocation2], 148
        %453 = vst.msk [vmem:[%s452] ss:$8 sm:$0x7] %vm311, %v438
        %454 = vst.msk [vmem:[%s452] ss:$8 sm:$0x0] %vm311, %v438
        %455 = vrot.lane.b32.xlu0 %v284, 108
        %v456 = vpop.permute.xlu0 %455
        %457 = vrot.lane.b32.xlu0 %v291, 108
        %v458 = vpop.permute.xlu0 %457
        %459 = vrot.lane.b32.xlu0 %v297, 108
        %v460 = vpop.permute.xlu0 %459
        %461 = vrot.lane.b32.xlu0 %v303, 108
        %v462 = vpop.permute.xlu0 %461
        %v463 = vrot.slane %v456, 1
        %v464 = vrot.slane %v458, 1
        %v465 = vrot.slane %v460, 1
        %v466 = vrot.slane %v462, 1
        %vm467 = vcmask 883712
        %v468 = vsel %vm467, %v456, %v463
        %v469 = vsel %vm467, %v458, %v464
        %v470 = vsel %vm467, %v460, %v465
        %v471 = vsel %vm467, %v462, %v466
        %s476 = scalar_lea.vmem [#allocation2], 5
        %477 = vst.msk [vmem:[%s476] ss:$8 sm:$0x7] %vm311, %v468
        %478 = vst.msk [vmem:[%s476] ss:$8 sm:$0x0] %vm311, %v468
        %s479 = scalar_lea.vmem [#allocation2], 53
        %480 = vst.msk [vmem:[%s479] ss:$8 sm:$0x7] %vm311, %v469
        %481 = vst.msk [vmem:[%s479] ss:$8 sm:$0x0] %vm311, %v469
        %s482 = scalar_lea.vmem [#allocation2], 101
        %483 = vst.msk [vmem:[%s482] ss:$8 sm:$0x7] %vm311, %v470
        %484 = vst.msk [vmem:[%s482] ss:$8 sm:$0x0] %vm311, %v470
        %s485 = scalar_lea.vmem [#allocation2], 149
        %486 = vst.msk [vmem:[%s485] ss:$8 sm:$0x7] %vm311, %v471
        %487 = vst.msk [vmem:[%s485] ss:$8 sm:$0x0] %vm311, %v471
        %488 = vrot.lane.b32.xlu0 %v284, 92
        %v489 = vpop.permute.xlu0 %488
        %490 = vrot.lane.b32.xlu0 %v291, 92
        %v491 = vpop.permute.xlu0 %490
        %492 = vrot.lane.b32.xlu0 %v297, 92
        %v493 = vpop.permute.xlu0 %492
        %494 = vrot.lane.b32.xlu0 %v303, 92
        %v495 = vpop.permute.xlu0 %494
        %v496 = vrot.slane %v489, 1
        %v497 = vrot.slane %v491, 1
        %v498 = vrot.slane %v493, 1
        %v499 = vrot.slane %v495, 1
        %vm500 = vcmask 752640
        %v501 = vsel %vm500, %v489, %v496
        %v502 = vsel %vm500, %v491, %v497
        %v503 = vsel %vm500, %v493, %v498
        %v504 = vsel %vm500, %v495, %v499
        %s509 = scalar_lea.vmem [#allocation2], 6
        %510 = vst.msk [vmem:[%s509] ss:$8 sm:$0x7] %vm311, %v501
        %511 = vst.msk [vmem:[%s509] ss:$8 sm:$0x0] %vm311, %v501
        %s512 = scalar_lea.vmem [#allocation2], 54
        %513 = vst.msk [vmem:[%s512] ss:$8 sm:$0x7] %vm311, %v502
        %514 = vst.msk [vmem:[%s512] ss:$8 sm:$0x0] %vm311, %v502
        %s515 = scalar_lea.vmem [#allocation2], 102
        %516 = vst.msk [vmem:[%s515] ss:$8 sm:$0x7] %vm311, %v503
        %517 = vst.msk [vmem:[%s515] ss:$8 sm:$0x0] %vm311, %v503
        %s518 = scalar_lea.vmem [#allocation2], 150
        %519 = vst.msk [vmem:[%s518] ss:$8 sm:$0x7] %vm311, %v504
        %520 = vst.msk [vmem:[%s518] ss:$8 sm:$0x0] %vm311, %v504
        %521 = vrot.lane.b32.xlu0 %v284, 91
        %v522 = vpop.permute.xlu0 %521
        %523 = vrot.lane.b32.xlu0 %v291, 91
        %v524 = vpop.permute.xlu0 %523
        %525 = vrot.lane.b32.xlu0 %v297, 91
        %v526 = vpop.permute.xlu0 %525
        %527 = vrot.lane.b32.xlu0 %v303, 91
        %v528 = vpop.permute.xlu0 %527
        %v529 = vrot.slane %v522, 1
        %v530 = vrot.slane %v524, 1
        %v531 = vrot.slane %v526, 1
        %v532 = vrot.slane %v528, 1
        %vm533 = vcmask 744448
        %v534 = vsel %vm533, %v522, %v529
        %v535 = vsel %vm533, %v524, %v530
        %v536 = vsel %vm533, %v526, %v531
        %v537 = vsel %vm533, %v528, %v532
        %s542 = scalar_lea.vmem [#allocation2], 7
        %543 = vst.msk [vmem:[%s542] ss:$8 sm:$0x7] %vm311, %v534
        %544 = vst.msk [vmem:[%s542] ss:$8 sm:$0x0] %vm311, %v534
        %s545 = scalar_lea.vmem [#allocation2], 55
        %546 = vst.msk [vmem:[%s545] ss:$8 sm:$0x7] %vm311, %v535
        %547 = vst.msk [vmem:[%s545] ss:$8 sm:$0x0] %vm311, %v535
        %s548 = scalar_lea.vmem [#allocation2], 103
        %549 = vst.msk [vmem:[%s548] ss:$8 sm:$0x7] %vm311, %v536
        %550 = vst.msk [vmem:[%s548] ss:$8 sm:$0x0] %vm311, %v536
        %s551 = scalar_lea.vmem [#allocation2], 151
        %552 = vst.msk [vmem:[%s551] ss:$8 sm:$0x7] %vm311, %v537
        %553 = vst.msk [vmem:[%s551] ss:$8 sm:$0x0] %vm311, %v537
        %554 = vrot.lane.b32.xlu0 %v284, 90
        %v555 = vpop.permute.xlu0 %554
        %556 = vrot.lane.b32.xlu0 %v291, 90
        %v557 = vpop.permute.xlu0 %556
        %558 = vrot.lane.b32.xlu0 %v297, 90
        %v559 = vpop.permute.xlu0 %558
        %560 = vrot.lane.b32.xlu0 %v303, 90
        %v561 = vpop.permute.xlu0 %560
        %v562 = vrot.slane %v555, 1
        %v563 = vrot.slane %v557, 1
        %v564 = vrot.slane %v559, 1
        %v565 = vrot.slane %v561, 1
        %vm566 = vcmask 736256
        %v567 = vsel %vm566, %v555, %v562
        %v568 = vsel %vm566, %v557, %v563
        %v569 = vsel %vm566, %v559, %v564
        %v570 = vsel %vm566, %v561, %v565
        %s575 = scalar_lea.vmem [#allocation2], 24
        %576 = vst.msk [vmem:[%s575] ss:$8 sm:$0x7] %vm311, %v567
        %577 = vst.msk [vmem:[%s575] ss:$8 sm:$0x0] %vm311, %v567
        %s578 = scalar_lea.vmem [#allocation2], 72
        %579 = vst.msk [vmem:[%s578] ss:$8 sm:$0x7] %vm311, %v568
        %580 = vst.msk [vmem:[%s578] ss:$8 sm:$0x0] %vm311, %v568
        %s581 = scalar_lea.vmem [#allocation2], 120
        %582 = vst.msk [vmem:[%s581] ss:$8 sm:$0x7] %vm311, %v569
        %583 = vst.msk [vmem:[%s581] ss:$8 sm:$0x0] %vm311, %v569
        %s584 = scalar_lea.vmem [#allocation2], 168
        %585 = vst.msk [vmem:[%s584] ss:$8 sm:$0x7] %vm311, %v570
        %586 = vst.msk [vmem:[%s584] ss:$8 sm:$0x0] %vm311, %v570
        %v587 = vld [vmem:[%s1] sm:$0xf]
        %v588 = vld [vmem:[%s2] sm:$0xf]
        %v589 = vld [vmem:[#allocation2] sm:$0xff]
        %v590 = vld [vmem:[#allocation2 + $0x8] sm:$0xff]
        %v591 = vld [vmem:[#allocation2 + $0x10] sm:$0xff]
        %v592 = vld [vmem:[#allocation2 + $0x18] sm:$0x1]
        %v593 = vld [vmem:[#allocation2 + $0x20] sm:$0x1]
        %v594 = vld [vmem:[#allocation2 + $0x28] sm:$0x1]
        %596 = vset.pattern.permute.xlu0 0
        %597 = vperm.xlu0 %596, %v588
        %v598 = vpop.permute.xlu0 %597
        %vm600 = vcmask 72704
        %v602 = vsel %vm600, %v587, 0
        %v605 = vsel %vm279, %v592, 0
        %v608 = vsel %vm279, %v593, 0
        %v611 = vsel %vm279, %v594, 0
        %613 = vmatpush.msra.mxu0 0.0
        %614 = vmatpush.msra.mxu0 0.0
        %615 = vmatpush.msra.mxu0 0.0
        %616 = vmatpush.msra.mxu0 0.0
        %617 = vmatpush.msra.mxu0 0.0
        %618 = vmatpush.msra.mxu0 0.0
        %619 = vmatpush.msra.mxu0 0.0
        %620 = vmatpush.msra.mxu0 0.0
        %621 = vmatpush.msra.mxu0 0.0
        %622 = vmatpush.msra.mxu0 0.0
        %623 = vmatpush.msra.mxu0 0.0
        %624 = vmatpush.msra.mxu0 0.0
        %625 = vmatpush.msra.mxu0 0.0
        %626 = vmatpush.msra.mxu0 0.0
        %627 = vmatpush.msra.mxu0 %v605
        %628 = vmatpush.msra.mxu0 %v589
        %629 = vmatmul.f32.gmra.mxu0 %v602
        %v630 = vpop.f32.mrf.mxu0
        %v631 = vadd.f32 %v598, %v630
        %632 = vdwg.mxu0
        %633 = vmatpush.msra.mxu0 0.0
        %634 = vmatpush.msra.mxu0 0.0
        %635 = vmatpush.msra.mxu0 0.0
        %636 = vmatpush.msra.mxu0 0.0
        %637 = vmatpush.msra.mxu0 0.0
        %638 = vmatpush.msra.mxu0 0.0
        %639 = vmatpush.msra.mxu0 0.0
        %640 = vmatpush.msra.mxu0 0.0
        %641 = vmatpush.msra.mxu0 0.0
        %642 = vmatpush.msra.mxu0 0.0
        %643 = vmatpush.msra.mxu0 0.0
        %644 = vmatpush.msra.mxu0 0.0
        %645 = vmatpush.msra.mxu0 0.0
        %646 = vmatpush.msra.mxu0 0.0
        %647 = vmatpush.msra.mxu0 %v608
        %648 = vmatpush.msra.mxu0 %v590
        %649 = vmatmul.f32.gmra.mxu0 %v602
        %v650 = vpop.f32.mrf.mxu0
        %v651 = vadd.f32 %v598, %v650
        %652 = vdwg.mxu0
        %653 = vmatpush.msra.mxu0 0.0
        %654 = vmatpush.msra.mxu0 0.0
        %655 = vmatpush.msra.mxu0 0.0
        %656 = vmatpush.msra.mxu0 0.0
        %657 = vmatpush.msra.mxu0 0.0
        %658 = vmatpush.msra.mxu0 0.0
        %659 = vmatpush.msra.mxu0 0.0
        %660 = vmatpush.msra.mxu0 0.0
        %661 = vmatpush.msra.mxu0 0.0
        %662 = vmatpush.msra.mxu0 0.0
        %663 = vmatpush.msra.mxu0 0.0
        %664 = vmatpush.msra.mxu0 0.0
        %665 = vmatpush.msra.mxu0 0.0
        %666 = vmatpush.msra.mxu0 0.0
        %667 = vmatpush.msra.mxu0 %v611
        %668 = vmatpush.msra.mxu0 %v591
        %669 = vmatmul.f32.gmra.mxu0 %v602
        %v670 = vpop.f32.mrf.mxu0
        %v671 = vadd.f32 %v598, %v670
        %672 = vdwg.mxu0
        %673 = vst [vmem:[#allocation3] sm:$0xf] %v631
        %674 = vst [vmem:[#allocation3 + $0x8] sm:$0xf] %v651
        %675 = vst [vmem:[#allocation3 + $0x10] sm:$0xf] %v671
        %s676 = scalar_lea.vmem [#allocation2], 48
        %v677 = vld [vmem:[%s676] sm:$0xff]
        %v678 = vld [vmem:[%s676 + $0x8] sm:$0xff]
        %v679 = vld [vmem:[%s676 + $0x10] sm:$0xff]
        %v680 = vld [vmem:[%s676 + $0x18] sm:$0x1]
        %v681 = vld [vmem:[%s676 + $0x20] sm:$0x1]
        %v682 = vld [vmem:[%s676 + $0x28] sm:$0x1]
        %v684 = vsel %vm279, %v680, 0
        %v687 = vsel %vm279, %v681, 0
        %v690 = vsel %vm279, %v682, 0
        %692 = vmatpush.msra.mxu0 0.0
        %693 = vmatpush.msra.mxu0 0.0
        %694 = vmatpush.msra.mxu0 0.0
        %695 = vmatpush.msra.mxu0 0.0
        %696 = vmatpush.msra.mxu0 0.0
        %697 = vmatpush.msra.mxu0 0.0
        %698 = vmatpush.msra.mxu0 0.0
        %699 = vmatpush.msra.mxu0 0.0
        %700 = vmatpush.msra.mxu0 0.0
        %701 = vmatpush.msra.mxu0 0.0
        %702 = vmatpush.msra.mxu0 0.0
        %703 = vmatpush.msra.mxu0 0.0
        %704 = vmatpush.msra.mxu0 0.0
        %705 = vmatpush.msra.mxu0 0.0
        %706 = vmatpush.msra.mxu0 %v684
        %707 = vmatpush.msra.mxu0 %v677
        %708 = vmatmul.f32.gmra.mxu0 %v602
        %v709 = vpop.f32.mrf.mxu0
        %v710 = vadd.f32 %v598, %v709
        %711 = vdwg.mxu0
        %712 = vmatpush.msra.mxu0 0.0
        %713 = vmatpush.msra.mxu0 0.0
        %714 = vmatpush.msra.mxu0 0.0
        %715 = vmatpush.msra.mxu0 0.0
        %716 = vmatpush.msra.mxu0 0.0
        %717 = vmatpush.msra.mxu0 0.0
        %718 = vmatpush.msra.mxu0 0.0
        %719 = vmatpush.msra.mxu0 0.0
        %720 = vmatpush.msra.mxu0 0.0
        %721 = vmatpush.msra.mxu0 0.0
        %722 = vmatpush.msra.mxu0 0.0
        %723 = vmatpush.msra.mxu0 0.0
        %724 = vmatpush.msra.mxu0 0.0
        %725 = vmatpush.msra.mxu0 0.0
        %726 = vmatpush.msra.mxu0 %v687
        %727 = vmatpush.msra.mxu0 %v678
        %728 = vmatmul.f32.gmra.mxu0 %v602
        %v729 = vpop.f32.mrf.mxu0
        %v730 = vadd.f32 %v598, %v729
        %731 = vdwg.mxu0
        %732 = vmatpush.msra.mxu0 0.0
        %733 = vmatpush.msra.mxu0 0.0
        %734 = vmatpush.msra.mxu0 0.0
        %735 = vmatpush.msra.mxu0 0.0
        %736 = vmatpush.msra.mxu0 0.0
        %737 = vmatpush.msra.mxu0 0.0
        %738 = vmatpush.msra.mxu0 0.0
        %739 = vmatpush.msra.mxu0 0.0
        %740 = vmatpush.msra.mxu0 0.0
        %741 = vmatpush.msra.mxu0 0.0
        %742 = vmatpush.msra.mxu0 0.0
        %743 = vmatpush.msra.mxu0 0.0
        %744 = vmatpush.msra.mxu0 0.0
        %745 = vmatpush.msra.mxu0 0.0
        %746 = vmatpush.msra.mxu0 %v690
        %747 = vmatpush.msra.mxu0 %v679
        %748 = vmatmul.f32.gmra.mxu0 %v602
        %v749 = vpop.f32.mrf.mxu0
        %v750 = vadd.f32 %v598, %v749
        %751 = vdwg.mxu0
        %752 = vst [vmem:[#allocation3 + $0x18] sm:$0xf] %v710
        %753 = vst [vmem:[#allocation3 + $0x20] sm:$0xf] %v730
        %754 = vst [vmem:[#allocation3 + $0x28] sm:$0xf] %v750
        %s755 = scalar_lea.vmem [#allocation2], 96
        %v756 = vld [vmem:[%s755] sm:$0xff]
        %v757 = vld [vmem:[%s755 + $0x8] sm:$0xff]
        %v758 = vld [vmem:[%s755 + $0x10] sm:$0xff]
        %v759 = vld [vmem:[%s755 + $0x18] sm:$0x1]
        %v760 = vld [vmem:[%s755 + $0x20] sm:$0x1]
        %v761 = vld [vmem:[%s755 + $0x28] sm:$0x1]
        %v763 = vsel %vm279, %v759, 0
        %v766 = vsel %vm279, %v760, 0
        %v769 = vsel %vm279, %v761, 0
        %771 = vmatpush.msra.mxu0 0.0
        %772 = vmatpush.msra.mxu0 0.0
        %773 = vmatpush.msra.mxu0 0.0
        %774 = vmatpush.msra.mxu0 0.0
        %775 = vmatpush.msra.mxu0 0.0
        %776 = vmatpush.msra.mxu0 0.0
        %777 = vmatpush.msra.mxu0 0.0
        %778 = vmatpush.msra.mxu0 0.0
        %779 = vmatpush.msra.mxu0 0.0
        %780 = vmatpush.msra.mxu0 0.0
        %781 = vmatpush.msra.mxu0 0.0
        %782 = vmatpush.msra.mxu0 0.0
        %783 = vmatpush.msra.mxu0 0.0
        %784 = vmatpush.msra.mxu0 0.0
        %785 = vmatpush.msra.mxu0 %v763
        %786 = vmatpush.msra.mxu0 %v756
        %787 = vmatmul.f32.gmra.mxu0 %v602
        %v788 = vpop.f32.mrf.mxu0
        %v789 = vadd.f32 %v598, %v788
        %790 = vdwg.mxu0
        %791 = vmatpush.msra.mxu0 0.0
        %792 = vmatpush.msra.mxu0 0.0
        %793 = vmatpush.msra.mxu0 0.0
        %794 = vmatpush.msra.mxu0 0.0
        %795 = vmatpush.msra.mxu0 0.0
        %796 = vmatpush.msra.mxu0 0.0
        %797 = vmatpush.msra.mxu0 0.0
        %798 = vmatpush.msra.mxu0 0.0
        %799 = vmatpush.msra.mxu0 0.0
        %800 = vmatpush.msra.mxu0 0.0
        %801 = vmatpush.msra.mxu0 0.0
        %802 = vmatpush.msra.mxu0 0.0
        %803 = vmatpush.msra.mxu0 0.0
        %804 = vmatpush.msra.mxu0 0.0
        %805 = vmatpush.msra.mxu0 %v766
        %806 = vmatpush.msra.mxu0 %v757
        %807 = vmatmul.f32.gmra.mxu0 %v602
        %v808 = vpop.f32.mrf.mxu0
        %v809 = vadd.f32 %v598, %v808
        %810 = vdwg.mxu0
        %811 = vmatpush.msra.mxu0 0.0
        %812 = vmatpush.msra.mxu0 0.0
        %813 = vmatpush.msra.mxu0 0.0
        %814 = vmatpush.msra.mxu0 0.0
        %815 = vmatpush.msra.mxu0 0.0
        %816 = vmatpush.msra.mxu0 0.0
        %817 = vmatpush.msra.mxu0 0.0
        %818 = vmatpush.msra.mxu0 0.0
        %819 = vmatpush.msra.mxu0 0.0
        %820 = vmatpush.msra.mxu0 0.0
        %821 = vmatpush.msra.mxu0 0.0
        %822 = vmatpush.msra.mxu0 0.0
        %823 = vmatpush.msra.mxu0 0.0
        %824 = vmatpush.msra.mxu0 0.0
        %825 = vmatpush.msra.mxu0 %v769
        %826 = vmatpush.msra.mxu0 %v758
        %827 = vmatmul.f32.gmra.mxu0 %v602
        %v828 = vpop.f32.mrf.mxu0
        %v829 = vadd.f32 %v598, %v828
        %830 = vdwg.mxu0
        %v834 = vrot.slane %v789, 4
        %v835 = vrot.slane %v809, 4
        %v836 = vrot.slane %v829, 4
        %840 = vst [vmem:[#allocation3] sm:$0xf0] %v834
        %841 = vst [vmem:[#allocation3 + $0x8] sm:$0xf0] %v835
        %842 = vst [vmem:[#allocation3 + $0x10] sm:$0xf0] %v836
        %s843 = scalar_lea.vmem [#allocation2], 144
        %v844 = vld [vmem:[%s843] sm:$0xff]
        %v845 = vld [vmem:[%s843 + $0x8] sm:$0xff]
        %v846 = vld [vmem:[%s843 + $0x10] sm:$0xff]
        %v847 = vld [vmem:[%s843 + $0x18] sm:$0x1]
        %v848 = vld [vmem:[%s843 + $0x20] sm:$0x1]
        %v849 = vld [vmem:[%s843 + $0x28] sm:$0x1]
        %v851 = vsel %vm279, %v847, 0
        %v854 = vsel %vm279, %v848, 0
        %v857 = vsel %vm279, %v849, 0
        %859 = vmatpush.msra.mxu0 0.0
        %860 = vmatpush.msra.mxu0 0.0
        %861 = vmatpush.msra.mxu0 0.0
        %862 = vmatpush.msra.mxu0 0.0
        %863 = vmatpush.msra.mxu0 0.0
        %864 = vmatpush.msra.mxu0 0.0
        %865 = vmatpush.msra.mxu0 0.0
        %866 = vmatpush.msra.mxu0 0.0
        %867 = vmatpush.msra.mxu0 0.0
        %868 = vmatpush.msra.mxu0 0.0
        %869 = vmatpush.msra.mxu0 0.0
        %870 = vmatpush.msra.mxu0 0.0
        %871 = vmatpush.msra.mxu0 0.0
        %872 = vmatpush.msra.mxu0 0.0
        %873 = vmatpush.msra.mxu0 %v851
        %874 = vmatpush.msra.mxu0 %v844
        %875 = vmatmul.f32.gmra.mxu0 %v602
        %v876 = vpop.f32.mrf.mxu0
        %v877 = vadd.f32 %v598, %v876
        %878 = vdwg.mxu0
        %879 = vmatpush.msra.mxu0 0.0
        %880 = vmatpush.msra.mxu0 0.0
        %881 = vmatpush.msra.mxu0 0.0
        %882 = vmatpush.msra.mxu0 0.0
        %883 = vmatpush.msra.mxu0 0.0
        %884 = vmatpush.msra.mxu0 0.0
        %885 = vmatpush.msra.mxu0 0.0
        %886 = vmatpush.msra.mxu0 0.0
        %887 = vmatpush.msra.mxu0 0.0
        %888 = vmatpush.msra.mxu0 0.0
        %889 = vmatpush.msra.mxu0 0.0
        %890 = vmatpush.msra.mxu0 0.0
        %891 = vmatpush.msra.mxu0 0.0
        %892 = vmatpush.msra.mxu0 0.0
        %893 = vmatpush.msra.mxu0 %v854
        %894 = vmatpush.msra.mxu0 %v845
        %895 = vmatmul.f32.gmra.mxu0 %v602
        %v896 = vpop.f32.mrf.mxu0
        %v897 = vadd.f32 %v598, %v896
        %898 = vdwg.mxu0
        %899 = vmatpush.msra.mxu0 0.0
        %900 = vmatpush.msra.mxu0 0.0
        %901 = vmatpush.msra.mxu0 0.0
        %902 = vmatpush.msra.mxu0 0.0
        %903 = vmatpush.msra.mxu0 0.0
        %904 = vmatpush.msra.mxu0 0.0
        %905 = vmatpush.msra.mxu0 0.0
        %906 = vmatpush.msra.mxu0 0.0
        %907 = vmatpush.msra.mxu0 0.0
        %908 = vmatpush.msra.mxu0 0.0
        %909 = vmatpush.msra.mxu0 0.0
        %910 = vmatpush.msra.mxu0 0.0
        %911 = vmatpush.msra.mxu0 0.0
        %912 = vmatpush.msra.mxu0 0.0
        %913 = vmatpush.msra.mxu0 %v857
        %914 = vmatpush.msra.mxu0 %v846
        %915 = vmatmul.f32.gmra.mxu0 %v602
        %v916 = vpop.f32.mrf.mxu0
        %v917 = vadd.f32 %v598, %v916
        %918 = vdwg.mxu0
        %v922 = vrot.slane %v877, 4
        %v923 = vrot.slane %v897, 4
        %v924 = vrot.slane %v917, 4
        %928 = vst [vmem:[#allocation3 + $0x18] sm:$0xf0] %v922
        %929 = vst [vmem:[#allocation3 + $0x20] sm:$0xf0] %v923
        %930 = vst [vmem:[#allocation3 + $0x28] sm:$0xf0] %v924
        %v931 = vld [vmem:[#allocation8] sm:$0x3f]
        %v932 = vld [vmem:[#allocation3] sm:$0xff]
        %v933 = vld [vmem:[#allocation3 + $0x8] sm:$0xff]
        %v934 = vld [vmem:[#allocation3 + $0x10] sm:$0xff]
        %v935 = vld [vmem:[#allocation3 + $0x18] sm:$0xff]
        %v936 = vld [vmem:[#allocation3 + $0x20] sm:$0xff]
        %v937 = vld [vmem:[#allocation3 + $0x28] sm:$0xff]
        %vm938 = vcmask 64512
        %v940 = vsel %vm938, %v931, 0
        %942 = vmatpush.msra.mxu0 0.0
        %943 = vmatpush.msra.mxu0 0.0
        %944 = vmatpush.msra.mxu0 0.0
        %945 = vmatpush.msra.mxu0 0.0
        %946 = vmatpush.msra.mxu0 0.0
        %947 = vmatpush.msra.mxu0 0.0
        %948 = vmatpush.msra.mxu0 0.0
        %949 = vmatpush.msra.mxu0 0.0
        %950 = vmatpush.msra.mxu0 0.0
        %951 = vmatpush.msra.mxu0 0.0
        %952 = vmatpush.msra.mxu0 0.0
        %953 = vmatpush.msra.mxu0 0.0
        %954 = vmatpush.msra.mxu0 0.0
        %955 = vmatpush.msra.mxu0 0.0
        %956 = vmatpush.msra.mxu0 0.0
        %957 = vmatpush.msra.mxu0 %v932
        %958 = vmatmul.f32.gmra.mxu0 %v940
        %v959 = vpop.f32.mrf.mxu0
        %v960 = vadd.f32 0.0, %v959
        %961 = vdwg.mxu0
        %962 = vmatpush.msra.mxu0 0.0
        %963 = vmatpush.msra.mxu0 0.0
        %964 = vmatpush.msra.mxu0 0.0
        %965 = vmatpush.msra.mxu0 0.0
        %966 = vmatpush.msra.mxu0 0.0
        %967 = vmatpush.msra.mxu0 0.0
        %968 = vmatpush.msra.mxu0 0.0
        %969 = vmatpush.msra.mxu0 0.0
        %970 = vmatpush.msra.mxu0 0.0
        %971 = vmatpush.msra.mxu0 0.0
        %972 = vmatpush.msra.mxu0 0.0
        %973 = vmatpush.msra.mxu0 0.0
        %974 = vmatpush.msra.mxu0 0.0
        %975 = vmatpush.msra.mxu0 0.0
        %976 = vmatpush.msra.mxu0 0.0
        %977 = vmatpush.msra.mxu0 %v933
        %978 = vmatmul.f32.gmra.mxu0 %v940
        %v979 = vpop.f32.mrf.mxu0
        %v980 = vadd.f32 0.0, %v979
        %981 = vdwg.mxu0
        %982 = vmatpush.msra.mxu0 0.0
        %983 = vmatpush.msra.mxu0 0.0
        %984 = vmatpush.msra.mxu0 0.0
        %985 = vmatpush.msra.mxu0 0.0
        %986 = vmatpush.msra.mxu0 0.0
        %987 = vmatpush.msra.mxu0 0.0
        %988 = vmatpush.msra.mxu0 0.0
        %989 = vmatpush.msra.mxu0 0.0
        %990 = vmatpush.msra.mxu0 0.0
        %991 = vmatpush.msra.mxu0 0.0
        %992 = vmatpush.msra.mxu0 0.0
        %993 = vmatpush.msra.mxu0 0.0
        %994 = vmatpush.msra.mxu0 0.0
        %995 = vmatpush.msra.mxu0 0.0
        %996 = vmatpush.msra.mxu0 0.0
        %997 = vmatpush.msra.mxu0 %v934
        %998 = vmatmul.f32.gmra.mxu0 %v940
        %v999 = vpop.f32.mrf.mxu0
        %v1000 = vadd.f32 0.0, %v999
        %1001 = vdwg.mxu0
        %1002 = vmatpush.msra.mxu0 0.0
        %1003 = vmatpush.msra.mxu0 0.0
        %1004 = vmatpush.msra.mxu0 0.0
        %1005 = vmatpush.msra.mxu0 0.0
        %1006 = vmatpush.msra.mxu0 0.0
        %1007 = vmatpush.msra.mxu0 0.0
        %1008 = vmatpush.msra.mxu0 0.0
        %1009 = vmatpush.msra.mxu0 0.0
        %1010 = vmatpush.msra.mxu0 0.0
        %1011 = vmatpush.msra.mxu0 0.0
        %1012 = vmatpush.msra.mxu0 0.0
        %1013 = vmatpush.msra.mxu0 0.0
        %1014 = vmatpush.msra.mxu0 0.0
        %1015 = vmatpush.msra.mxu0 0.0
        %1016 = vmatpush.msra.mxu0 0.0
        %1017 = vmatpush.msra.mxu0 %v935
        %1018 = vmatmul.f32.gmra.mxu0 %v940
        %v1019 = vpop.f32.mrf.mxu0
        %v1020 = vadd.f32 0.0, %v1019
        %1021 = vdwg.mxu0
        %1022 = vmatpush.msra.mxu0 0.0
        %1023 = vmatpush.msra.mxu0 0.0
        %1024 = vmatpush.msra.mxu0 0.0
        %1025 = vmatpush.msra.mxu0 0.0
        %1026 = vmatpush.msra.mxu0 0.0
        %1027 = vmatpush.msra.mxu0 0.0
        %1028 = vmatpush.msra.mxu0 0.0
        %1029 = vmatpush.msra.mxu0 0.0
        %1030 = vmatpush.msra.mxu0 0.0
        %1031 = vmatpush.msra.mxu0 0.0
        %1032 = vmatpush.msra.mxu0 0.0
        %1033 = vmatpush.msra.mxu0 0.0
        %1034 = vmatpush.msra.mxu0 0.0
        %1035 = vmatpush.msra.mxu0 0.0
        %1036 = vmatpush.msra.mxu0 0.0
        %1037 = vmatpush.msra.mxu0 %v936
        %1038 = vmatmul.f32.gmra.mxu0 %v940
        %v1039 = vpop.f32.mrf.mxu0
        %v1040 = vadd.f32 0.0, %v1039
        %1041 = vdwg.mxu0
        %1042 = vmatpush.msra.mxu0 0.0
        %1043 = vmatpush.msra.mxu0 0.0
        %1044 = vmatpush.msra.mxu0 0.0
        %1045 = vmatpush.msra.mxu0 0.0
        %1046 = vmatpush.msra.mxu0 0.0
        %1047 = vmatpush.msra.mxu0 0.0
        %1048 = vmatpush.msra.mxu0 0.0
        %1049 = vmatpush.msra.mxu0 0.0
        %1050 = vmatpush.msra.mxu0 0.0
        %1051 = vmatpush.msra.mxu0 0.0
        %1052 = vmatpush.msra.mxu0 0.0
        %1053 = vmatpush.msra.mxu0 0.0
        %1054 = vmatpush.msra.mxu0 0.0
        %1055 = vmatpush.msra.mxu0 0.0
        %1056 = vmatpush.msra.mxu0 0.0
        %1057 = vmatpush.msra.mxu0 %v937
        %1058 = vmatmul.f32.gmra.mxu0 %v940
        %v1059 = vpop.f32.mrf.mxu0
        %v1060 = vadd.f32 0.0, %v1059
        %1061 = vdwg.mxu0
        %1062 = vst [vmem:[#allocation4] sm:$0x7] %v960
        %1063 = vst [vmem:[#allocation4 + $0x8] sm:$0x7] %v980
        %1064 = vst [vmem:[#allocation4 + $0x10] sm:$0x7] %v1000
        %v1068 = vrot.slane %v1020, 5
        %v1069 = vrot.slane %v1040, 5
        %v1070 = vrot.slane %v1060, 5
        %1074 = vst [vmem:[#allocation4] sm:$0x38] %v1068
        %1075 = vst [vmem:[#allocation4 + $0x8] sm:$0x38] %v1069
        %1076 = vst [vmem:[#allocation4 + $0x10] sm:$0x38] %v1070
        %v1080 = vrot.slane %v960, 3
        %v1081 = vrot.slane %v980, 3
        %v1082 = vrot.slane %v1000, 3
        %s1086 = scalar_lea.vmem [#allocation4], 24
        %1087 = vst [vmem:[%s1086] sm:$0x7] %v1080
        %1088 = vst [vmem:[%s1086 + $0x8] sm:$0x7] %v1081
        %1089 = vst [vmem:[%s1086 + $0x10] sm:$0x7] %v1082
        %1090 = vst [vmem:[%s1086] sm:$0x38] %v1020
        %1091 = vst [vmem:[%s1086 + $0x8] sm:$0x38] %v1040
        %1092 = vst [vmem:[%s1086 + $0x10] sm:$0x38] %v1060
        %v1093 = vld [vmem:[#allocation10] sm:$0xf]
        %v1094 = vld [vmem:[#allocation4] sm:$0x3f]
        %v1095 = vld [vmem:[#allocation4 + $0x8] sm:$0x3f]
        %v1096 = vld [vmem:[#allocation4 + $0x10] sm:$0x3f]
        %vm1097 = vcmask 48128
        %v1099 = vsel %vm1097, %v1093, 0
        %vm1101 = vcmask 1045504
        %v1103 = vsel %vm1101, %v1094, 0
        %v1106 = vsel %vm1101, %v1095, 0
        %v1109 = vsel %vm1101, %v1096, 0
        %1111 = vmatpush.msra.mxu0 0.0
        %1112 = vmatpush.msra.mxu0 0.0
        %1113 = vmatpush.msra.mxu0 0.0
        %1114 = vmatpush.msra.mxu0 0.0
        %1115 = vmatpush.msra.mxu0 0.0
        %1116 = vmatpush.msra.mxu0 0.0
        %1117 = vmatpush.msra.mxu0 0.0
        %1118 = vmatpush.msra.mxu0 0.0
        %1119 = vmatpush.msra.mxu0 0.0
        %1120 = vmatpush.msra.mxu0 0.0
        %1121 = vmatpush.msra.mxu0 0.0
        %1122 = vmatpush.msra.mxu0 0.0
        %1123 = vmatpush.msra.mxu0 0.0
        %1124 = vmatpush.msra.mxu0 0.0
        %1125 = vmatpush.msra.mxu0 0.0
        %1126 = vmatpush.msra.mxu0 %v1103
        %1127 = vmatmul.f32.gmra.mxu0 %v1099
        %v1128 = vpop.f32.mrf.mxu0
        %v1129 = vadd.f32 0.0, %v1128
        %1130 = vdwg.mxu0
        %1131 = vmatpush.msra.mxu0 0.0
        %1132 = vmatpush.msra.mxu0 0.0
        %1133 = vmatpush.msra.mxu0 0.0
        %1134 = vmatpush.msra.mxu0 0.0
        %1135 = vmatpush.msra.mxu0 0.0
        %1136 = vmatpush.msra.mxu0 0.0
        %1137 = vmatpush.msra.mxu0 0.0
        %1138 = vmatpush.msra.mxu0 0.0
        %1139 = vmatpush.msra.mxu0 0.0
        %1140 = vmatpush.msra.mxu0 0.0
        %1141 = vmatpush.msra.mxu0 0.0
        %1142 = vmatpush.msra.mxu0 0.0
        %1143 = vmatpush.msra.mxu0 0.0
        %1144 = vmatpush.msra.mxu0 0.0
        %1145 = vmatpush.msra.mxu0 0.0
        %1146 = vmatpush.msra.mxu0 %v1106
        %1147 = vmatmul.f32.gmra.mxu0 %v1099
        %v1148 = vpop.f32.mrf.mxu0
        %v1149 = vadd.f32 0.0, %v1148
        %1150 = vdwg.mxu0
        %1151 = vmatpush.msra.mxu0 0.0
        %1152 = vmatpush.msra.mxu0 0.0
        %1153 = vmatpush.msra.mxu0 0.0
        %1154 = vmatpush.msra.mxu0 0.0
        %1155 = vmatpush.msra.mxu0 0.0
        %1156 = vmatpush.msra.mxu0 0.0
        %1157 = vmatpush.msra.mxu0 0.0
        %1158 = vmatpush.msra.mxu0 0.0
        %1159 = vmatpush.msra.mxu0 0.0
        %1160 = vmatpush.msra.mxu0 0.0
        %1161 = vmatpush.msra.mxu0 0.0
        %1162 = vmatpush.msra.mxu0 0.0
        %1163 = vmatpush.msra.mxu0 0.0
        %1164 = vmatpush.msra.mxu0 0.0
        %1165 = vmatpush.msra.mxu0 0.0
        %1166 = vmatpush.msra.mxu0 %v1109
        %1167 = vmatmul.f32.gmra.mxu0 %v1099
        %v1168 = vpop.f32.mrf.mxu0
        %v1169 = vadd.f32 0.0, %v1168
        %1170 = vdwg.mxu0
        %1171 = vst [vmem:[%s271] sm:$0xf] %v1129
        %1172 = vst [vmem:[%s271 + $0x8] sm:$0xf] %v1149
        %vm1173 = vcmask 257024
        %1174 = vst.msk [vmem:[%s271 + $0x10] sm:$0xf] %vm1173, %v1169
        %v1175 = vld [vmem:[%s1086] sm:$0x3f]
        %v1176 = vld [vmem:[%s1086 + $0x8] sm:$0x3f]
        %v1177 = vld [vmem:[%s1086 + $0x10] sm:$0x3f]
        %v1179 = vsel %vm1101, %v1175, 0
        %v1182 = vsel %vm1101, %v1176, 0
        %v1185 = vsel %vm1101, %v1177, 0
        %1187 = vmatpush.msra.mxu0 0.0
        %1188 = vmatpush.msra.mxu0 0.0
        %1189 = vmatpush.msra.mxu0 0.0
        %1190 = vmatpush.msra.mxu0 0.0
        %1191 = vmatpush.msra.mxu0 0.0
        %1192 = vmatpush.msra.mxu0 0.0
        %1193 = vmatpush.msra.mxu0 0.0
        %1194 = vmatpush.msra.mxu0 0.0
        %1195 = vmatpush.msra.mxu0 0.0
        %1196 = vmatpush.msra.mxu0 0.0
        %1197 = vmatpush.msra.mxu0 0.0
        %1198 = vmatpush.msra.mxu0 0.0
        %1199 = vmatpush.msra.mxu0 0.0
        %1200 = vmatpush.msra.mxu0 0.0
        %1201 = vmatpush.msra.mxu0 0.0
        %1202 = vmatpush.msra.mxu0 %v1179
        %1203 = vmatmul.f32.gmra.mxu0 %v1099
        %v1204 = vpop.f32.mrf.mxu0
        %v1205 = vadd.f32 0.0, %v1204
        %1206 = vdwg.mxu0
        %1207 = vmatpush.msra.mxu0 0.0
        %1208 = vmatpush.msra.mxu0 0.0
        %1209 = vmatpush.msra.mxu0 0.0
        %1210 = vmatpush.msra.mxu0 0.0
        %1211 = vmatpush.msra.mxu0 0.0
        %1212 = vmatpush.msra.mxu0 0.0
        %1213 = vmatpush.msra.mxu0 0.0
        %1214 = vmatpush.msra.mxu0 0.0
        %1215 = vmatpush.msra.mxu0 0.0
        %1216 = vmatpush.msra.mxu0 0.0
        %1217 = vmatpush.msra.mxu0 0.0
        %1218 = vmatpush.msra.mxu0 0.0
        %1219 = vmatpush.msra.mxu0 0.0
        %1220 = vmatpush.msra.mxu0 0.0
        %1221 = vmatpush.msra.mxu0 0.0
        %1222 = vmatpush.msra.mxu0 %v1182
        %1223 = vmatmul.f32.gmra.mxu0 %v1099
        %v1224 = vpop.f32.mrf.mxu0
        %v1225 = vadd.f32 0.0, %v1224
        %1226 = vdwg.mxu0
        %1227 = vmatpush.msra.mxu0 0.0
        %1228 = vmatpush.msra.mxu0 0.0
        %1229 = vmatpush.msra.mxu0 0.0
        %1230 = vmatpush.msra.mxu0 0.0
        %1231 = vmatpush.msra.mxu0 0.0
        %1232 = vmatpush.msra.mxu0 0.0
        %1233 = vmatpush.msra.mxu0 0.0
        %1234 = vmatpush.msra.mxu0 0.0
        %1235 = vmatpush.msra.mxu0 0.0
        %1236 = vmatpush.msra.mxu0 0.0
        %1237 = vmatpush.msra.mxu0 0.0
        %1238 = vmatpush.msra.mxu0 0.0
        %1239 = vmatpush.msra.mxu0 0.0
        %1240 = vmatpush.msra.mxu0 0.0
        %1241 = vmatpush.msra.mxu0 0.0
        %1242 = vmatpush.msra.mxu0 %v1185
        %1243 = vmatmul.f32.gmra.mxu0 %v1099
        %v1244 = vpop.f32.mrf.mxu0
        %v1245 = vadd.f32 0.0, %v1244
        %1246 = vdwg.mxu0
        %v1250 = vrot.slane %v1205, 4
        %v1251 = vrot.slane %v1225, 4
        %v1252 = vrot.slane %v1245, 4
        %1256 = vst [vmem:[%s271] sm:$0xf0] %v1250
        %1257 = vst [vmem:[%s271 + $0x8] sm:$0xf0] %v1251
        %vm1258 = vcmask 261124
        %1259 = vst.msk [vmem:[%s271 + $0x10] sm:$0xf0] %vm1258, %v1252
        %s1260 = sand.u32 %s141, 1
        %s1261 = scalar_lea.sflag [#allocation7], %s1260
        %s1262 = sand.u32 %s141, 1
        %s1263 = smul.addr %s1262, 24
        %s1264 = scalar_lea.vmem [#allocation11], %s1263
        // Predicated region
        $region53: #{tpu_custom_call.1} parent=39 // pred_check
          %p1265 = pneg %p151
        $region54: #{tpu_custom_call.1} parent=39 // pred_check_branch
          %1267 = sbr.rel (%p1265) target = $region56
        $region55: #{tpu_custom_call.1} parent=39 // pred_region
          %1269 = vsyncadd %s1261, 0
          %s1270 = smul.addr %s23, 3
          %s1271 = smul.addr %s1270, 8
          %s1272 = scalar_lea.hbm %s5, %s1271
          %s1274 = sshll.u32 %s1264, 4
          %s1275 = int_to_ptr.vmem [resolvable:$true] %s1274
          %s1276 = sshll.u32 %s1272, 4
          %s1277 = int_to_ptr.hbm [resolvable:$true] %s1276
          %1279 = dma.vmem_to_hbm [thread:$0]  %s1275, 384, %s1277, %s1261
        $region56: #{tpu_custom_call.1} parent=39 // pred_fallthru
          _
      $region40: #{tpu_custom_call.1} parent=5 // pred_fallthru
        _
      %p1280 = scmp.le.s32.totalorder 2, %s18
      // Predicated region
      $region57: #{tpu_custom_call.1} parent=5 // pred_check
        %p1281 = pneg %p1280
      $region58: #{tpu_custom_call.1} parent=5 // pred_check_branch
        %1283 = sbr.rel (%p1281) target = $region60
      $region59: #{tpu_custom_call.1} parent=5 // pred_region
        %s1284 = ssub.s32 %s18, 2
        // Predicated region
        $region61: #{tpu_custom_call.1} parent=59 // pred_check
          %p1285 = pneg %p157
        $region62: #{tpu_custom_call.1} parent=59 // pred_check_branch
          %1287 = sbr.rel (%p1285) target = $region64
        $region63: #{tpu_custom_call.1} parent=59 // pred_region
          %s1288 = sand.u32 %s142, 1
          %s1289 = scalar_lea.sflag [#allocation7], %s1288
          %s1290 = sand.u32 %s142, 1
          %s1291 = smul.addr %s1290, 24
          %s1292 = scalar_lea.vmem [#allocation11], %s1291
          %1294 = dma.done %s1289, 384
        $region64: #{tpu_custom_call.1} parent=59 // pred_fallthru
          _
      $region60: #{tpu_custom_call.1} parent=5 // pred_fallthru
        _
    $region6: #{tpu_custom_call.1} parent=1 // loop_footer
      %s22 = sadd.s32 1, %s18
    $region7: #{tpu_custom_call.1} parent=1 // loop_footer_branch
      %17 = sbr.rel target = $region3
    $region8: #{tpu_custom_call.1} parent=1 // loop_exit
      _
    %1295 = vsyncpa [#allocation6], 1
    %s1296 = scalar_lea.sflag [#allocation6], 1
    %1297 = vsyncpa %s1296, 1
    %1298 = vsyncpa [#allocation9], 1
    %1299 = vsyncpa [#allocation7], 1
    %s1300 = scalar_lea.sflag [#allocation7], 1
    %1301 = vsyncpa %s1300, 1

</llo_original>
